<compile_context>
chip_gen: v6e
topology: v6e:2x2x1
jax: 0.10.0
libtpu: 0.0.40
codegen_flags: <defaults>
</compile_context>

<pallas_src>
import math

import jax
import jax.numpy as jnp
import numpy as np
from jax.experimental import pallas as pl
from jax.experimental.pallas import tpu as pltpu

LANE = 128


def sage_mean_kernel(adj_ref, feat_src_ref, feat_dst_ref,
                     w_neigh_t_ref, w_self_t_ref, b_self_ref,
                     out_ref, acc_ref, deg_ref):
    """One (dst-block i, src-block k) grid step.

    adj_ref:       (TN, TK)       bf16 adjacency tile, A[i, j] = 1 iff edge j->i
    feat_src_ref:  (TK, F_in)     bf16 source-node features for src block k
    feat_dst_ref:  (TN, F_in)     bf16 dst-node features for dst block i
    w_neigh_t_ref: (F_in, F_out)  bf16 fc_neigh.weight^T (pre-transposed in wrapper)
    w_self_t_ref:  (F_in, F_out)  bf16 fc_self.weight^T  (pre-transposed in wrapper)
    b_self_ref:    (1, F_out)     f32  fc_self.bias
    out_ref:       (TN, F_out)    output block (written at the last k step)
    acc_ref:       (TN, F_in)     f32 scratch: running sum_j A[i, j] * feat_src[j]
    deg_ref:       (TN, 1)        f32 scratch: running in-degree
    """
    k = pl.program_id(1)

    @pl.when(k == 0)
    def _init():
        acc_ref[...] = jnp.zeros_like(acc_ref)
        deg_ref[...] = jnp.zeros_like(deg_ref)

    adj = adj_ref[...]
    # Degree (message count) accumulated in f32: the 0/1 tile entries are exact
    # in bf16 but large integer sums would not be, so reduce in f32.
    deg_ref[...] += jnp.sum(adj.astype(jnp.float32), axis=-1, keepdims=True)
    # Partial neighbor sum on the MXU with f32 accumulation.
    acc_ref[...] += jnp.dot(adj, feat_src_ref[...],
                            preferred_element_type=jnp.float32)

    @pl.when(k == pl.num_programs(1) - 1)
    def _finalize():
        # mean = sum / max(deg, 1); 0-in-degree rows have an exactly-zero sum.
        inv_deg = pl.reciprocal(jnp.maximum(deg_ref[...], 1.0), approx=True)
        # Row scaling commutes with the bias-free projection, so scale the
        # smaller (TN, F_out) result instead of the (TN, F_in) aggregate.
        h_neigh = jnp.dot(acc_ref[...].astype(w_neigh_t_ref.dtype),
                          w_neigh_t_ref[...],
                          preferred_element_type=jnp.float32) * inv_deg
        h_self = jnp.dot(feat_dst_ref[...], w_self_t_ref[...],
                         preferred_element_type=jnp.float32)
        out_ref[...] = (h_self + h_neigh + b_self_ref[...]).astype(out_ref.dtype)


def _round_up(x, m):
    return (x + m - 1) // m * m


def _pad2d(x, rows, cols):
    r, c = x.shape
    if r == rows and c == cols:
        return x
    return jnp.pad(x, ((0, rows - r), (0, cols - c)))


def sage_conv_mean(adj, feat, w_neigh, w_self, b_self, *,
                   tile_n=128, tile_k=128,
                   compute_dtype=jnp.bfloat16,
                   vmem_limit_bytes=48 * 1024 * 1024):
    """SAGEConv('mean'): out[i] = feat[i] @ W_self^T + b + (mean_j A[i,j]*feat[j]) @ W_neigh^T."""
    assert tile_n % LANE == 0 and tile_k % LANE == 0
    N_dst, N_src = adj.shape
    N, F_in = feat.shape
    assert N_dst == N_src == N, "homogeneous graph expected (feat_src == feat_dst)"
    F_out, F_in_w = w_neigh.shape
    assert F_in_w == F_in and w_self.shape == (F_out, F_in)
    out_dtype = feat.dtype

    # Pad node and feature axes so every block is lane/sublane dense
    # (multiples of 128) -> unmasked vector stores and full MXU tiles.
    n_pad = _round_up(N, math.lcm(tile_n, tile_k))
    fi_pad = _round_up(F_in, LANE)
    fo_pad = _round_up(F_out, LANE)

    adj_p = _pad2d(adj.astype(compute_dtype), n_pad, n_pad)
    feat_p = _pad2d(feat.astype(compute_dtype), n_pad, fi_pad)
    # Pre-transpose the PyTorch (out, in) weights once on the host/XLA side so
    # the kernel never pays a per-step in-kernel transpose.
    w_neigh_t = _pad2d(w_neigh.T.astype(compute_dtype), fi_pad, fo_pad)
    w_self_t = _pad2d(w_self.T.astype(compute_dtype), fi_pad, fo_pad)
    b_p = _pad2d(b_self.reshape(1, F_out).astype(jnp.float32), 1, fo_pad)

    # Axis 0: independent dst-node blocks (parallel, megacore-shardable).
    # Axis 1: reduction over source-node blocks (arbitrary, last in grid).
    grid = (n_pad // tile_n, n_pad // tile_k)

    out_p = pl.pallas_call(
        sage_mean_kernel,
        out_shape=jax.ShapeDtypeStruct((n_pad, fo_pad), out_dtype),
        grid_spec=pltpu.PrefetchScalarGridSpec(
            num_scalar_prefetch=0,
            grid=grid,
            in_specs=[
                pl.BlockSpec((tile_n, tile_k), lambda i, k: (i, k)),   # adjacency tile
                pl.BlockSpec((tile_k, fi_pad), lambda i, k: (k, 0)),   # src feats, block k
                pl.BlockSpec((tile_n, fi_pad), lambda i, k: (i, 0)),   # dst feats, block i (k-invariant)
                pl.BlockSpec((fi_pad, fo_pad), lambda i, k: (0, 0)),   # W_neigh^T (resident)
                pl.BlockSpec((fi_pad, fo_pad), lambda i, k: (0, 0)),   # W_self^T  (resident)
                pl.BlockSpec((1, fo_pad), lambda i, k: (0, 0)),        # b_self    (resident)
            ],
            out_specs=pl.BlockSpec((tile_n, fo_pad), lambda i, k: (i, 0)),
            scratch_shapes=[
                pltpu.VMEM((tile_n, fi_pad), jnp.float32),   # neighbor-sum accumulator
                pltpu.VMEM((tile_n, 1), jnp.float32),        # in-degree accumulator
            ],
        ),
        compiler_params=pltpu.CompilerParams(
            dimension_semantics=("parallel", "arbitrary"),
            vmem_limit_bytes=vmem_limit_bytes,
        ),
    )(adj_p, feat_p, feat_p, w_neigh_t, w_self_t, b_p)

    return out_p[:N, :F_out]


def xavier_uniform(key, out_f, in_f, gain):
    bound = gain * np.sqrt(6.0 / (in_f + out_f))
    return jax.random.uniform(key, (out_f, in_f), jnp.float32, -bound, bound)


if __name__ == "__main__":
    N, F_IN, F_OUT = 256, 128, 128

    key = jax.random.PRNGKey(0)
    k_adj, k_feat, k_wn, k_ws, k_b = jax.random.split(key, 5)

    # Random directed graph as dense adjacency (A[i, j] = edge j -> i).
    adj = jax.random.bernoulli(k_adj, p=0.1, shape=(N, N)).astype(jnp.float32)
    feat = jax.random.normal(k_feat, (N, F_IN), jnp.float32)

    # Glorot-uniform with gain = calculate_gain('relu') = sqrt(2), as in reset_parameters().
    gain = float(np.sqrt(2.0))
    w_neigh = xavier_uniform(k_wn, F_OUT, F_IN, gain)                    # fc_neigh.weight (bias=False)
    w_self = xavier_uniform(k_ws, F_OUT, F_IN, gain)                     # fc_self.weight
    b_self = jax.random.uniform(k_b, (F_OUT,), jnp.float32, -0.1, 0.1)   # fc_self.bias

    out = sage_conv_mean(adj, feat, w_neigh, w_self, b_self)
    out = jax.block_until_ready(out)

    # Precision-matched reference (bf16 MXU operands, f32 accumulation, exact divide).
    adj_b = adj.astype(jnp.bfloat16)
    feat_b = feat.astype(jnp.bfloat16)
    deg = jnp.sum(adj, axis=-1, keepdims=True)
    neigh_sum = jnp.dot(adj_b, feat_b, preferred_element_type=jnp.float32)
    h_neigh = jnp.dot(neigh_sum.astype(jnp.bfloat16),
                      w_neigh.T.astype(jnp.bfloat16),
                      preferred_element_type=jnp.float32) / jnp.maximum(deg, 1.0)
    h_self = jnp.dot(feat_b, w_self.T.astype(jnp.bfloat16),
                     preferred_element_type=jnp.float32) + b_self[None, :]
    ref_matched = h_self + h_neigh
    np.testing.assert_allclose(np.asarray(out), np.asarray(ref_matched),
                               rtol=1e-2, atol=1e-2)

    # Full-f32 module reference (looser tolerance: kernel runs the MXU in bf16).
    neigh_f32 = (adj @ feat) / jnp.maximum(deg, 1.0)
    ref_f32 = feat @ w_self.T + b_self[None, :] + neigh_f32 @ w_neigh.T
    np.testing.assert_allclose(np.asarray(out), np.asarray(ref_f32),
                               rtol=5e-2, atol=5e-2)

    print("KERNEL_OK")
</pallas_src>

<mosaic_0001>
module attributes {stable_mosaic.version = 11 : i64} {
  func.func @sage_mean_kernel(%arg0: i32, %arg1: i32, %arg2: memref<128x128xbf16, #tpu.memory_space<vmem>>, %arg3: memref<128x128xbf16, #tpu.memory_space<vmem>>, %arg4: memref<128x128xbf16, #tpu.memory_space<vmem>>, %arg5: memref<128x128xbf16, #tpu.memory_space<vmem>>, %arg6: memref<128x128xbf16, #tpu.memory_space<vmem>>, %arg7: memref<1x128xf32, #tpu.memory_space<vmem>>, %arg8: memref<128x128xf32, #tpu.memory_space<vmem>>, %arg9: memref<128x128xf32, #tpu.memory_space<vmem>>, %arg10: memref<128x1xf32, #tpu.memory_space<vmem>>) attributes {dimension_semantics = [#tpu.dimension_semantics<parallel>, #tpu.dimension_semantics<arbitrary>], iteration_bounds = array<i64: 2, 2>, scalar_prefetch = 0 : i64, scratch_operands = 2 : i64, tpu.core_type = #tpu.core_type<tc>, window_params = [{transform_indices = @transform_0, window_bounds = array<i64: 128, 128>}, {transform_indices = @transform_1, window_bounds = array<i64: 128, 128>}, {transform_indices = @transform_2, window_bounds = array<i64: 128, 128>}, {pipeline_mode = #tpu.pipeline_mode<synchronous>, transform_indices = @transform_3, window_bounds = array<i64: 128, 128>}, {pipeline_mode = #tpu.pipeline_mode<synchronous>, transform_indices = @transform_4, window_bounds = array<i64: 128, 128>}, {pipeline_mode = #tpu.pipeline_mode<synchronous>, transform_indices = @transform_5, window_bounds = array<i64: 1, 128>}, {transform_indices = @transform_6, window_bounds = array<i64: 128, 128>}]} {
    %c0_i32 = arith.constant 0 : i32
    %0 = arith.cmpi eq, %arg1, %c0_i32 : i32
    %1 = arith.extui %0 : i1 to i32
    %c0_i32_0 = arith.constant 0 : i32
    %2 = arith.cmpi ne, %1, %c0_i32_0 : i32
    scf.if %2 {
      %cst_14 = arith.constant 0.000000e+00 : f32
      %18 = vector.broadcast %cst_14 : f32 to vector<128x128xf32>
      %c0_15 = arith.constant 0 : index
      %c0_16 = arith.constant 0 : index
      %19 = vector.load %arg9[%c0_15, %c0_16] : memref<128x128xf32, #tpu.memory_space<vmem>>, vector<128x128xf32>
      tpu.vector_store %arg9[%c0_15, %c0_16], %18 {strides = array<i32>} : memref<128x128xf32, #tpu.memory_space<vmem>>, vector<128x128xf32>,
      %cst_17 = arith.constant 0.000000e+00 : f32
      %20 = vector.broadcast %cst_17 : f32 to vector<128x1xf32>
      %c0_18 = arith.constant 0 : index
      %c0_19 = arith.constant 0 : index
      %21 = vector.load %arg10[%c0_18, %c0_19] : memref<128x1xf32, #tpu.memory_space<vmem>>, vector<128x1xf32>
      tpu.vector_store %arg10[%c0_18, %c0_19], %20 {strides = array<i32>} : memref<128x1xf32, #tpu.memory_space<vmem>>, vector<128x1xf32>,
    } else {
    }
    %c0 = arith.constant 0 : index
    %c0_1 = arith.constant 0 : index
    %3 = vector.load %arg2[%c0, %c0_1] : memref<128x128xbf16, #tpu.memory_space<vmem>>, vector<128x128xbf16>
    %c0_2 = arith.constant 0 : index
    %c0_3 = arith.constant 0 : index
    %4 = vector.load %arg10[%c0_2, %c0_3] : memref<128x1xf32, #tpu.memory_space<vmem>>, vector<128x1xf32>
    %5 = arith.extf %3 : vector<128x128xbf16> to vector<128x128xf32>
    %cst = arith.constant dense<0.000000e+00> : vector<128xf32>
    %6 = vector.multi_reduction <add>, %5, %cst [1] : vector<128x128xf32> to vector<128xf32>
    %7 = vector.shape_cast %6 : vector<128xf32> to vector<128x1xf32>
    %8 = arith.addf %4, %7 : vector<128x1xf32>
    %c0_4 = arith.constant 0 : index
    %c0_5 = arith.constant 0 : index
    %9 = vector.load %arg10[%c0_4, %c0_5] : memref<128x1xf32, #tpu.memory_space<vmem>>, vector<128x1xf32>
    tpu.vector_store %arg10[%c0_4, %c0_5], %8 {strides = array<i32>} : memref<128x1xf32, #tpu.memory_space<vmem>>, vector<128x1xf32>,
    %c0_6 = arith.constant 0 : index
    %c0_7 = arith.constant 0 : index
    %10 = vector.load %arg9[%c0_6, %c0_7] : memref<128x128xf32, #tpu.memory_space<vmem>>, vector<128x128xf32>
    %c0_8 = arith.constant 0 : index
    %c0_9 = arith.constant 0 : index
    %11 = vector.load %arg3[%c0_8, %c0_9] : memref<128x128xbf16, #tpu.memory_space<vmem>>, vector<128x128xbf16>
    %cst_10 = arith.constant dense<0.000000e+00> : vector<128x128xf32>
    %12 = tpu.matmul %3, %11, %cst_10 {dimension_numbers = #tpu.dot_dimension_numbers<[1], [0], [0], [1], [0, 0, 1, 1], [], []>} : vector<128x128xbf16>, vector<128x128xbf16>, vector<128x128xf32> -> vector<128x128xf32>
    %13 = arith.addf %10, %12 : vector<128x128xf32>
    %c0_11 = arith.constant 0 : index
    %c0_12 = arith.constant 0 : index
    %14 = vector.load %arg9[%c0_11, %c0_12] : memref<128x128xf32, #tpu.memory_space<vmem>>, vector<128x128xf32>
    tpu.vector_store %arg9[%c0_11, %c0_12], %13 {strides = array<i32>} : memref<128x128xf32, #tpu.memory_space<vmem>>, vector<128x128xf32>,
    %c1_i32 = arith.constant 1 : i32
    %15 = arith.cmpi eq, %arg1, %c1_i32 : i32
    %16 = arith.extui %15 : i1 to i32
    %c0_i32_13 = arith.constant 0 : i32
    %17 = arith.cmpi ne, %16, %c0_i32_13 : i32
    scf.if %17 {
      %c0_14 = arith.constant 0 : index
      %c0_15 = arith.constant 0 : index
      %18 = vector.load %arg10[%c0_14, %c0_15] : memref<128x1xf32, #tpu.memory_space<vmem>>, vector<128x1xf32>
      %cst_16 = arith.constant 1.000000e+00 : f32
      %19 = vector.broadcast %cst_16 : f32 to vector<128x1xf32>
      %20 = arith.maximumf %18, %19 : vector<128x1xf32>
      %21 = tpu.reciprocal %20 {approx = true} : vector<128x1xf32> -> vector<128x1xf32>
      %c0_17 = arith.constant 0 : index
      %c0_18 = arith.constant 0 : index
      %22 = vector.load %arg9[%c0_17, %c0_18] : memref<128x128xf32, #tpu.memory_space<vmem>>, vector<128x128xf32>
      %23 = arith.truncf %22 : vector<128x128xf32> to vector<128x128xbf16>
      %c0_19 = arith.constant 0 : index
      %c0_20 = arith.constant 0 : index
      %24 = vector.load %arg5[%c0_19, %c0_20] : memref<128x128xbf16, #tpu.memory_space<vmem>>, vector<128x128xbf16>
      %cst_21 = arith.constant dense<0.000000e+00> : vector<128x128xf32>
      %25 = tpu.matmul %23, %24, %cst_21 {dimension_numbers = #tpu.dot_dimension_numbers<[1], [0], [0], [1], [0, 0, 1, 1], [], []>} : vector<128x128xbf16>, vector<128x128xbf16>, vector<128x128xf32> -> vector<128x128xf32>
      %26 = vector.broadcast %21 : vector<128x1xf32> to vector<128x128xf32>
      %27 = arith.mulf %25, %26 : vector<128x128xf32>
      %c0_22 = arith.constant 0 : index
      %c0_23 = arith.constant 0 : index
      %28 = vector.load %arg4[%c0_22, %c0_23] : memref<128x128xbf16, #tpu.memory_space<vmem>>, vector<128x128xbf16>
      %c0_24 = arith.constant 0 : index
      %c0_25 = arith.constant 0 : index
      %29 = vector.load %arg6[%c0_24, %c0_25] : memref<128x128xbf16, #tpu.memory_space<vmem>>, vector<128x128xbf16>
      %cst_26 = arith.constant dense<0.000000e+00> : vector<128x128xf32>
      %30 = tpu.matmul %28, %29, %cst_26 {dimension_numbers = #tpu.dot_dimension_numbers<[1], [0], [0], [1], [0, 0, 1, 1], [], []>} : vector<128x128xbf16>, vector<128x128xbf16>, vector<128x128xf32> -> vector<128x128xf32>
      %31 = arith.addf %30, %27 : vector<128x128xf32>
      %c0_27 = arith.constant 0 : index
      %c0_28 = arith.constant 0 : index
      %32 = vector.load %arg7[%c0_27, %c0_28] : memref<1x128xf32, #tpu.memory_space<vmem>>, vector<1x128xf32>
      %33 = vector.broadcast %32 : vector<1x128xf32> to vector<128x128xf32>
      %34 = arith.addf %31, %33 : vector<128x128xf32>
      %c0_29 = arith.constant 0 : index
      %c0_30 = arith.constant 0 : index
      %35 = vector.load %arg8[%c0_29, %c0_30] : memref<128x128xf32, #tpu.memory_space<vmem>>, vector<128x128xf32>
      tpu.vector_store %arg8[%c0_29, %c0_30], %34 {strides = array<i32>} : memref<128x128xf32, #tpu.memory_space<vmem>>, vector<128x128xf32>,
    } else {
    }
    return
  }
  func.func @transform_0(%arg0: i32, %arg1: i32) -> (i32, i32) {
    %c0_i32 = arith.constant 0 : i32
    return %arg0, %arg1 : i32, i32
  }
  func.func @transform_1(%arg0: i32, %arg1: i32) -> (i32, i32) {
    %c0_i32 = arith.constant 0 : i32
    %c0_i32_0 = arith.constant 0 : i32
    return %arg1, %c0_i32 : i32, i32
  }
  func.func @transform_2(%arg0: i32, %arg1: i32) -> (i32, i32) {
    %c0_i32 = arith.constant 0 : i32
    %c0_i32_0 = arith.constant 0 : i32
    return %arg0, %c0_i32 : i32, i32
  }
  func.func @transform_3(%arg0: i32, %arg1: i32) -> (i32, i32) {
    %c0_i32 = arith.constant 0 : i32
    %c0_i32_0 = arith.constant 0 : i32
    %c0_i32_1 = arith.constant 0 : i32
    return %c0_i32, %c0_i32_0 : i32, i32
  }
  func.func @transform_4(%arg0: i32, %arg1: i32) -> (i32, i32) {
    %c0_i32 = arith.constant 0 : i32
    %c0_i32_0 = arith.constant 0 : i32
    %c0_i32_1 = arith.constant 0 : i32
    return %c0_i32, %c0_i32_0 : i32, i32
  }
  func.func @transform_5(%arg0: i32, %arg1: i32) -> (i32, i32) {
    %c0_i32 = arith.constant 0 : i32
    %c0_i32_0 = arith.constant 0 : i32
    %c0_i32_1 = arith.constant 0 : i32
    return %c0_i32, %c0_i32_0 : i32, i32
  }
  func.func @transform_6(%arg0: i32, %arg1: i32) -> (i32, i32) {
    %c0_i32 = arith.constant 0 : i32
    %c0_i32_0 = arith.constant 0 : i32
    return %arg0, %c0_i32 : i32, i32
  }
}

</mosaic_0001>

<llo_original>
// kernel: tpu_custom_call.1
$region0: #{tpu_custom_call.1}
  #allocation0 [shape = 'u32[]', space=smem, size = 0x4, offset = 0x4, fixed_abs, tag = 'smem constant byte address 0x4 - core index']
  #allocation1 [shape = 'u32[144,128]{1,0:T(1,128)}', space=vmem, size = 0x12000, scoped, tag = 'internal scratch']
  #allocation2 [shape = 'f32[128,128]{1,0:T(8,128)}', space=vmem, size = 0x10000, scoped, tag = 'scratch operand']
  #allocation3 [shape = 'f32[128,1]{1,0:T(8,128)}', space=vmem, size = 0x10000, scoped, tag = 'scratch operand']
  %s0 = inlined_call_operand.hbm [shape: bf16[256,256], index: 0, kind: input, shape index: {}]
  %s1 = inlined_call_operand.hbm [shape: bf16[256,128], index: 1, kind: input, shape index: {}]
  %s2 = inlined_call_operand.hbm [shape: bf16[256,128], index: 2, kind: input, shape index: {}]
  %s3 = inlined_call_operand.hbm [shape: bf16[128,128], index: 3, kind: input, shape index: {}]
  %s4 = inlined_call_operand.hbm [shape: bf16[128,128], index: 4, kind: input, shape index: {}]
  %s5 = inlined_call_operand.vmem [shape: f32[1,128], index: 5, kind: input, shape index: {}]
  %s6 = inlined_call_operand.hbm [shape: f32[256,128], index: 6, kind: output, shape index: {}]
  %s7 = sld [smem:[#allocation0]]
  $region85: #{tpu_custom_call.1} parent=0
    _
  %s9 = ssub.s32 1, %s7
  %s10 = scalar_select 0, %s9, %s7
  $region1: #{tpu_custom_call.1} parent=0
    #allocation4 [shape = 'u8[65536]{0}', space=vmem, size = 0x10000, scoped, tag = 'input window, operand 0']
    #allocation5 [shape = 's32[2]{0}', space=sflag, size = 0x8, scoped, tag = 'scoped memory for tpu_custom_call.1']
    #allocation6 [shape = 's32[2]{0}', space=sflag, size = 0x8, scoped, tag = 'scoped memory for tpu_custom_call.1']
    #allocation7 [shape = 'u8[65536]{0}', space=vmem, size = 0x10000, scoped, tag = 'input window, operand 1']
    #allocation8 [shape = 's32[2]{0}', space=sflag, size = 0x8, scoped, tag = 'scoped memory for tpu_custom_call.1']
    #allocation9 [shape = 'u8[65536]{0}', space=vmem, size = 0x10000, scoped, tag = 'input window, operand 2']
    #allocation10 [shape = 'u8[32768]{0}', space=vmem, size = 0x8000, scoped, tag = 'input window, operand 3, single buffered']
    #allocation11 [shape = 's32[1]{0}', space=sflag, size = 0x4, scoped, tag = 'scoped memory for tpu_custom_call.1']
    #allocation12 [shape = 'u8[32768]{0}', space=vmem, size = 0x8000, scoped, tag = 'input window, operand 4, single buffered']
    #allocation13 [shape = 'u8[131072]{0}', space=vmem, size = 0x20000, scoped, tag = 'output window, operand 0']
    %11 = vsyncpa [#allocation5], 0
    %s12 = scalar_lea.sflag [#allocation5], 1
    %13 = vsyncpa %s12, 0
    %14 = vsyncpa [#allocation8], 0
    %s15 = scalar_lea.sflag [#allocation8], 1
    %16 = vsyncpa %s15, 0
    %17 = vsyncpa [#allocation11], 0
    %18 = vsyncpa [#allocation6], 0
    %s19 = scalar_lea.sflag [#allocation6], 1
    %20 = vsyncpa %s19, 0
    loop: start=0, step=1, limit=6
    $region2: #{tpu_custom_call.1} parent=1 // loop_pre_header
      _
    $region3: #{tpu_custom_call.1} parent=1 // loop_header
      %s22 = sphi 0, %s26
      %p23 = scmp.ge.s32.totalorder %s22, 6
      %s29 = sphi 0, %s41
      %s30 = sphi 0, %s37
      %s31 = sphi 0, %s29
      %s32 = sphi 0, %s30
      %s33 = sphi 0, %s31
      %s34 = sphi 0, %s32
      %s46 = sphi 0, %s48
      %s49 = sphi 0, %s46
      %s50 = sphi 0, %s49
      %s66 = sphi 0, %s50
      %s72 = sphi 0, %s74
      %s75 = sphi 0, %s72
      %s76 = sphi 0, %s75
      %s92 = sphi 0, %s76
      %s98 = sphi 0, %s100
      %s101 = sphi 0, %s98
      %s102 = sphi 0, %s101
      %s118 = sphi 0, %s102
      %s122 = sphi 0, %s122
      %s124 = sphi 0, %s122
      %s125 = sphi 0, %s124
      %s139 = sphi 0, %s125
      %s143 = sphi 0, %s143
      %s145 = sphi 0, %s143
      %s146 = sphi 0, %s145
      %s160 = sphi 0, %s146
      %s164 = sphi 0, %s164
      %s166 = sphi 0, %s164
      %s167 = sphi 0, %s166
      %s181 = sphi 0, %s167
      %s187 = sphi 0, %s189
      %s190 = sphi 0, %s187
      %s191 = sphi 0, %s190
      %s207 = sphi 0, %s191
    $region4: #{tpu_custom_call.1} parent=1 // loop_header_branch
      %25 = sbr.rel (%p23) target = $region8
    $region5: #{tpu_custom_call.1} parent=1 // loop_body
      %s27 = ssub.s32 %s22, 1
      %s28 = ssub.s32 %s22, 2
      %s35 = sadd.s32 1, %s30
      %p36 = scmp.ge.s32.totalorder %s35, 2
      %s37 = scalar_select %p36, 0, %s35
      %s38 = sadd.s32 1, %s29
      %s39 = scalar_select %p36, %s38, %s29
      %p40 = scmp.ge.s32.totalorder %s39, 2
      %s41 = scalar_select %p40, 0, %s39
      %s42 = ssub.s32 %s29, %s41
      %s43 = ssub.s32 %s30, %s37
      %s44 = sor.u32 %s42, %s43
      %p45 = scmp.eq.s32.totalorder %s44, 0
      %s47 = sadd.s32 %s46, 1
      %s48 = scalar_select %p45, %s46, %s47
      %p51 = pneg %p45
      %p52 = scmp.eq.s32.totalorder %s22, 3
      %p53 = por %p51, %p52
      %p54 = scmp.ne.s32.totalorder %s46, %s49
      %p55 = scmp.eq.s32.totalorder %s22, 0
      %p56 = por %p54, %p55
      %p57 = scmp.ne.s32.totalorder %s46, %s49
      %p58 = scmp.eq.s32.totalorder %s27, 3
      %p59 = por %p57, %p58
      %p60 = scmp.ne.s32.totalorder %s49, %s50
      %p61 = scmp.eq.s32.totalorder %s27, 0
      %p62 = por %p60, %p61
      %p63 = scmp.ne.s32.totalorder %s49, %s50
      %p64 = scmp.eq.s32.totalorder %s28, 3
      %p65 = por %p63, %p64
      %p67 = scmp.ne.s32.totalorder %s50, %s66
      %p68 = scmp.eq.s32.totalorder %s28, 0
      %p69 = por %p67, %p68
      %s70 = ssub.s32 %s30, %s37
      %p71 = scmp.eq.s32.totalorder %s70, 0
      %s73 = sadd.s32 %s72, 1
      %s74 = scalar_select %p71, %s72, %s73
      %p77 = pneg %p71
      %p78 = scmp.eq.s32.totalorder %s22, 3
      %p79 = por %p77, %p78
      %p80 = scmp.ne.s32.totalorder %s72, %s75
      %p81 = scmp.eq.s32.totalorder %s22, 0
      %p82 = por %p80, %p81
      %p83 = scmp.ne.s32.totalorder %s72, %s75
      %p84 = scmp.eq.s32.totalorder %s27, 3
      %p85 = por %p83, %p84
      %p86 = scmp.ne.s32.totalorder %s75, %s76
      %p87 = scmp.eq.s32.totalorder %s27, 0
      %p88 = por %p86, %p87
      %p89 = scmp.ne.s32.totalorder %s75, %s76
      %p90 = scmp.eq.s32.totalorder %s28, 3
      %p91 = por %p89, %p90
      %p93 = scmp.ne.s32.totalorder %s76, %s92
      %p94 = scmp.eq.s32.totalorder %s28, 0
      %p95 = por %p93, %p94
      %s96 = ssub.s32 %s29, %s41
      %p97 = scmp.eq.s32.totalorder %s96, 0
      %s99 = sadd.s32 %s98, 1
      %s100 = scalar_select %p97, %s98, %s99
      %p103 = pneg %p97
      %p104 = scmp.eq.s32.totalorder %s22, 3
      %p105 = por %p103, %p104
      %p106 = scmp.ne.s32.totalorder %s98, %s101
      %p107 = scmp.eq.s32.totalorder %s22, 0
      %p108 = por %p106, %p107
      %p109 = scmp.ne.s32.totalorder %s98, %s101
      %p110 = scmp.eq.s32.totalorder %s27, 3
      %p111 = por %p109, %p110
      %p112 = scmp.ne.s32.totalorder %s101, %s102
      %p113 = scmp.eq.s32.totalorder %s27, 0
      %p114 = por %p112, %p113
      %p115 = scmp.ne.s32.totalorder %s101, %s102
      %p116 = scmp.eq.s32.totalorder %s28, 3
      %p117 = por %p115, %p116
      %p119 = scmp.ne.s32.totalorder %s102, %s118
      %p120 = scmp.eq.s32.totalorder %s28, 0
      %p121 = por %p119, %p120
      %s123 = sadd.s32 %s122, 1
      %p126 = scmp.eq.s32.totalorder %s22, 3
      %p127 = scmp.ne.s32.totalorder %s122, %s124
      %p128 = scmp.eq.s32.totalorder %s22, 0
      %p129 = por %p127, %p128
      %p130 = scmp.ne.s32.totalorder %s122, %s124
      %p131 = scmp.eq.s32.totalorder %s27, 3
      %p132 = por %p130, %p131
      %p133 = scmp.ne.s32.totalorder %s124, %s125
      %p134 = scmp.eq.s32.totalorder %s27, 0
      %p135 = por %p133, %p134
      %p136 = scmp.ne.s32.totalorder %s124, %s125
      %p137 = scmp.eq.s32.totalorder %s28, 3
      %p138 = por %p136, %p137
      %p140 = scmp.ne.s32.totalorder %s125, %s139
      %p141 = scmp.eq.s32.totalorder %s28, 0
      %p142 = por %p140, %p141
      %s144 = sadd.s32 %s143, 1
      %p147 = scmp.eq.s32.totalorder %s22, 3
      %p148 = scmp.ne.s32.totalorder %s143, %s145
      %p149 = scmp.eq.s32.totalorder %s22, 0
      %p150 = por %p148, %p149
      %p151 = scmp.ne.s32.totalorder %s143, %s145
      %p152 = scmp.eq.s32.totalorder %s27, 3
      %p153 = por %p151, %p152
      %p154 = scmp.ne.s32.totalorder %s145, %s146
      %p155 = scmp.eq.s32.totalorder %s27, 0
      %p156 = por %p154, %p155
      %p157 = scmp.ne.s32.totalorder %s145, %s146
      %p158 = scmp.eq.s32.totalorder %s28, 3
      %p159 = por %p157, %p158
      %p161 = scmp.ne.s32.totalorder %s146, %s160
      %p162 = scmp.eq.s32.totalorder %s28, 0
      %p163 = por %p161, %p162
      %s165 = sadd.s32 %s164, 1
      %p168 = scmp.eq.s32.totalorder %s22, 3
      %p169 = scmp.ne.s32.totalorder %s164, %s166
      %p170 = scmp.eq.s32.totalorder %s22, 0
      %p171 = por %p169, %p170
      %p172 = scmp.ne.s32.totalorder %s164, %s166
      %p173 = scmp.eq.s32.totalorder %s27, 3
      %p174 = por %p172, %p173
      %p175 = scmp.ne.s32.totalorder %s166, %s167
      %p176 = scmp.eq.s32.totalorder %s27, 0
      %p177 = por %p175, %p176
      %p178 = scmp.ne.s32.totalorder %s166, %s167
      %p179 = scmp.eq.s32.totalorder %s28, 3
      %p180 = por %p178, %p179
      %p182 = scmp.ne.s32.totalorder %s167, %s181
      %p183 = scmp.eq.s32.totalorder %s28, 0
      %p184 = por %p182, %p183
      %s185 = ssub.s32 %s29, %s41
      %p186 = scmp.eq.s32.totalorder %s185, 0
      %s188 = sadd.s32 %s187, 1
      %s189 = scalar_select %p186, %s187, %s188
      %p192 = pneg %p186
      %p193 = scmp.eq.s32.totalorder %s22, 3
      %p194 = por %p192, %p193
      %p195 = scmp.ne.s32.totalorder %s187, %s190
      %p196 = scmp.eq.s32.totalorder %s22, 0
      %p197 = por %p195, %p196
      %p198 = scmp.ne.s32.totalorder %s187, %s190
      %p199 = scmp.eq.s32.totalorder %s27, 3
      %p200 = por %p198, %p199
      %p201 = scmp.ne.s32.totalorder %s190, %s191
      %p202 = scmp.eq.s32.totalorder %s27, 0
      %p203 = por %p201, %p202
      %p204 = scmp.ne.s32.totalorder %s190, %s191
      %p205 = scmp.eq.s32.totalorder %s28, 3
      %p206 = por %p204, %p205
      %p208 = scmp.ne.s32.totalorder %s191, %s207
      %p209 = scmp.eq.s32.totalorder %s28, 0
      %p210 = por %p208, %p209
      %p211 = scmp.le.s32.totalorder 1, %s22
      %p212 = scmp.lt.s32.totalorder %s22, 5
      %p213 = pnand %p211, %p212
      %p214 = pneg %p213
      // Predicated region
      $region9: #{tpu_custom_call.1} parent=5 // pred_check
        _
      $region10: #{tpu_custom_call.1} parent=5 // pred_check_branch
        %216 = sbr.rel (%p213) target = $region12
      $region11: #{tpu_custom_call.1} parent=5 // pred_region
        %s217 = ssub.s32 %s22, 1
        // Predicated region
        $region13: #{tpu_custom_call.1} parent=11 // pred_check
          %p218 = pneg %p135
        $region14: #{tpu_custom_call.1} parent=11 // pred_check_branch
          %220 = sbr.rel (%p218) target = $region16
        $region15: #{tpu_custom_call.1} parent=11 // pred_region
          %s222 = ssub.s32 1024, 1024
          %223 = vsyncadd [#allocation11], %s222
          %s224 = sshll.u32 [#allocation10], 4
          %s225 = int_to_ptr.vmem [resolvable:$true] %s224
          %230 = dma.hbm_to_vmem [thread:$0]  %s3, 1024, %s225, [#allocation11], 64, 64, 4
        $region16: #{tpu_custom_call.1} parent=11 // pred_fallthru
          _
        // Predicated region
        $region17: #{tpu_custom_call.1} parent=11 // pred_check
          %p231 = pneg %p156
        $region18: #{tpu_custom_call.1} parent=11 // pred_check_branch
          %233 = sbr.rel (%p231) target = $region20
        $region19: #{tpu_custom_call.1} parent=11 // pred_region
          %s235 = ssub.s32 1024, 1024
          %236 = vsyncadd [#allocation11], %s235
          %s237 = sshll.u32 [#allocation12], 4
          %s238 = int_to_ptr.vmem [resolvable:$true] %s237
          %243 = dma.hbm_to_vmem [thread:$0]  %s4, 1024, %s238, [#allocation11], 64, 64, 4
        $region20: #{tpu_custom_call.1} parent=11 // pred_fallthru
          _
        // Predicated region
        $region21: #{tpu_custom_call.1} parent=11 // pred_check
          %p244 = pneg %p177
        $region22: #{tpu_custom_call.1} parent=11 // pred_check_branch
          %246 = sbr.rel (%p244) target = $region24
        $region23: #{tpu_custom_call.1} parent=11 // pred_region
          _
        $region24: #{tpu_custom_call.1} parent=11 // pred_fallthru
          _
      $region12: #{tpu_custom_call.1} parent=5 // pred_fallthru
        _
      %p247 = scmp.lt.s32.totalorder %s22, 4
      // Predicated region
      $region25: #{tpu_custom_call.1} parent=5 // pred_check
        %p248 = pneg %p247
      $region26: #{tpu_custom_call.1} parent=5 // pred_check_branch
        %250 = sbr.rel (%p248) target = $region28
      $region27: #{tpu_custom_call.1} parent=5 // pred_region
        // Predicated region
        $region29: #{tpu_custom_call.1} parent=27 // pred_check
          %p251 = pneg %p56
        $region30: #{tpu_custom_call.1} parent=27 // pred_check_branch
          %253 = sbr.rel (%p251) target = $region32
        $region31: #{tpu_custom_call.1} parent=27 // pred_region
          %s254 = sand.u32 %s46, 1
          %s255 = scalar_lea.sflag [#allocation5], %s254
          %s256 = sand.u32 %s46, 1
          %s257 = smul.addr %s256, 64
          %s258 = scalar_lea.vmem [#allocation4], %s257
          %s259 = smul.u32 16, %s29
          %s261 = ssub.s32 1024, 1024
          %262 = vsyncadd %s255, %s261
          %s263 = smul.addr %s259, 2
          %s264 = sadd.s32 %s30, %s263
          %s265 = smul.addr %s264, 64
          %s266 = scalar_lea.hbm %s0, %s265
          %s267 = sshll.u32 %s258, 4
          %s268 = int_to_ptr.vmem [resolvable:$true] %s267
          %273 = dma.hbm_to_vmem [thread:$0]  %s266, 1024, %s268, %s255, 128, 64, 4
        $region32: #{tpu_custom_call.1} parent=27 // pred_fallthru
          _
        // Predicated region
        $region33: #{tpu_custom_call.1} parent=27 // pred_check
          %p274 = pneg %p82
        $region34: #{tpu_custom_call.1} parent=27 // pred_check_branch
          %276 = sbr.rel (%p274) target = $region36
        $region35: #{tpu_custom_call.1} parent=27 // pred_region
          %s277 = sand.u32 %s22, 1
          %s278 = scalar_lea.sflag [#allocation8], %s277
          %s279 = sand.u32 %s72, 1
          %s280 = smul.addr %s279, 64
          %s281 = scalar_lea.vmem [#allocation7], %s280
          %s282 = smul.u32 16, %s30
          %s284 = ssub.s32 1024, 1024
          %285 = vsyncadd %s278, %s284
          %s286 = smul.addr %s282, 64
          %s287 = scalar_lea.hbm %s1, %s286
          %s288 = sshll.u32 %s281, 4
          %s289 = int_to_ptr.vmem [resolvable:$true] %s288
          %294 = dma.hbm_to_vmem [thread:$0]  %s287, 1024, %s289, %s278, 64, 64, 4
        $region36: #{tpu_custom_call.1} parent=27 // pred_fallthru
          _
        // Predicated region
        $region37: #{tpu_custom_call.1} parent=27 // pred_check
          %p295 = pneg %p108
        $region38: #{tpu_custom_call.1} parent=27 // pred_check_branch
          %297 = sbr.rel (%p295) target = $region40
        $region39: #{tpu_custom_call.1} parent=27 // pred_region
          %s298 = sand.u32 %s22, 1
          %s299 = scalar_lea.sflag [#allocation8], %s298
          %s300 = sand.u32 %s98, 1
          %s301 = smul.addr %s300, 64
          %s302 = scalar_lea.vmem [#allocation9], %s301
          %s303 = smul.u32 16, %s29
          %s305 = ssub.s32 1024, 1024
          %306 = vsyncadd %s299, %s305
          %s307 = smul.addr %s303, 64
          %s308 = scalar_lea.hbm %s2, %s307
          %s309 = sshll.u32 %s302, 4
          %s310 = int_to_ptr.vmem [resolvable:$true] %s309
          %315 = dma.hbm_to_vmem [thread:$0]  %s308, 1024, %s310, %s299, 64, 64, 4
        $region40: #{tpu_custom_call.1} parent=27 // pred_fallthru
          _
      $region28: #{tpu_custom_call.1} parent=5 // pred_fallthru
        _
      %p316 = scmp.le.s32.totalorder 1, %s22
      %p317 = scmp.lt.s32.totalorder %s22, 5
      %p318 = pnand %p316, %p317
      %p319 = pneg %p318
      // Predicated region
      $region41: #{tpu_custom_call.1} parent=5 // pred_check
        _
      $region42: #{tpu_custom_call.1} parent=5 // pred_check_branch
        %321 = sbr.rel (%p318) target = $region44
      $region43: #{tpu_custom_call.1} parent=5 // pred_region
        %s322 = ssub.s32 %s22, 1
        %s323 = sand.u32 %s49, 1
        %s324 = scalar_lea.sflag [#allocation5], %s323
        %s325 = sand.u32 %s49, 1
        %s326 = smul.addr %s325, 64
        %s327 = scalar_lea.vmem [#allocation4], %s326
        // Predicated region
        $region45: #{tpu_custom_call.1} parent=43 // pred_check
          %p328 = pneg %p62
        $region46: #{tpu_custom_call.1} parent=43 // pred_check_branch
          %330 = sbr.rel (%p328) target = $region48
        $region47: #{tpu_custom_call.1} parent=43 // pred_region
          %331 = dma.done %s324, 1024
        $region48: #{tpu_custom_call.1} parent=43 // pred_fallthru
          _
        %s332 = sand.u32 %s27, 1
        %s333 = scalar_lea.sflag [#allocation8], %s332
        %s334 = sand.u32 %s75, 1
        %s335 = smul.addr %s334, 64
        %s336 = scalar_lea.vmem [#allocation7], %s335
        // Predicated region
        $region49: #{tpu_custom_call.1} parent=43 // pred_check
          %p337 = pneg %p88
        $region50: #{tpu_custom_call.1} parent=43 // pred_check_branch
          %339 = sbr.rel (%p337) target = $region52
        $region51: #{tpu_custom_call.1} parent=43 // pred_region
          %340 = dma.done %s333, 1024
        $region52: #{tpu_custom_call.1} parent=43 // pred_fallthru
          _
        %s341 = sand.u32 %s27, 1
        %s342 = scalar_lea.sflag [#allocation8], %s341
        %s343 = sand.u32 %s101, 1
        %s344 = smul.addr %s343, 64
        %s345 = scalar_lea.vmem [#allocation9], %s344
        // Predicated region
        $region53: #{tpu_custom_call.1} parent=43 // pred_check
          %p346 = pneg %p114
        $region54: #{tpu_custom_call.1} parent=43 // pred_check_branch
          %348 = sbr.rel (%p346) target = $region56
        $region55: #{tpu_custom_call.1} parent=43 // pred_region
          %349 = dma.done %s342, 1024
        $region56: #{tpu_custom_call.1} parent=43 // pred_fallthru
          _
        // Predicated region
        $region57: #{tpu_custom_call.1} parent=43 // pred_check
          %p350 = pneg %p135
        $region58: #{tpu_custom_call.1} parent=43 // pred_check_branch
          %352 = sbr.rel (%p350) target = $region60
        $region59: #{tpu_custom_call.1} parent=43 // pred_region
          %353 = dma.done [#allocation11], 1024
        $region60: #{tpu_custom_call.1} parent=43 // pred_fallthru
          _
        // Predicated region
        $region61: #{tpu_custom_call.1} parent=43 // pred_check
          %p354 = pneg %p156
        $region62: #{tpu_custom_call.1} parent=43 // pred_check_branch
          %356 = sbr.rel (%p354) target = $region64
        $region63: #{tpu_custom_call.1} parent=43 // pred_region
          %357 = dma.done [#allocation11], 1024
        $region64: #{tpu_custom_call.1} parent=43 // pred_fallthru
          _
        %s358 = sand.u32 %s49, 1
        %s359 = scalar_lea.sflag [#allocation5], %s358
        %s360 = sand.u32 %s49, 1
        %s361 = smul.addr %s360, 64
        %s362 = scalar_lea.vmem [#allocation4], %s361
        %p363 = pneg %p62
        %p364 = pneg %p59
        %s365 = sand.u32 %s27, 1
        %s366 = scalar_lea.sflag [#allocation8], %s365
        %s367 = sand.u32 %s75, 1
        %s368 = smul.addr %s367, 64
        %s369 = scalar_lea.vmem [#allocation7], %s368
        %p370 = pneg %p88
        %p371 = pneg %p85
        %s372 = sand.u32 %s27, 1
        %s373 = scalar_lea.sflag [#allocation8], %s372
        %s374 = sand.u32 %s101, 1
        %s375 = smul.addr %s374, 64
        %s376 = scalar_lea.vmem [#allocation9], %s375
        %p377 = pneg %p114
        %p378 = pneg %p111
        %p379 = pneg %p135
        %p380 = pneg %p132
        %p381 = pneg %p156
        %p382 = pneg %p153
        %p383 = pneg %p177
        %p384 = pneg %p174
        %p385 = pneg %p203
        %p386 = pneg %p200
        %s387 = sand.u32 %s190, 1
        %s388 = scalar_lea.sflag [#allocation6], %s387
        %s389 = sand.u32 %s190, 1
        %s390 = smul.addr %s389, 128
        %s391 = scalar_lea.vmem [#allocation13], %s390
        %s392 = smul.u32 16, %s31
        %s393 = smul.u32 16, %s32
        %s394 = smul.u32 16, %s31
        %s395 = smul.u32 16, %s31
        %p397 = scmp.eq.s32.totalorder %s32, 0
        // Predicated region
        $region65: #{tpu_custom_call.1} parent=43 // pred_check
          %p398 = pneg %p397
        $region66: #{tpu_custom_call.1} parent=43 // pred_check_branch
          %400 = sbr.rel (%p398) target = $region68
        $region67: #{tpu_custom_call.1} parent=43 // pred_region
          %401 = vst [vmem:[#allocation2] sm:$0xff] 0.0
          %402 = vst [vmem:[#allocation2 + $0x8] sm:$0xff] 0.0
          %403 = vst [vmem:[#allocation2 + $0x10] sm:$0xff] 0.0
          %404 = vst [vmem:[#allocation2 + $0x18] sm:$0xff] 0.0
          %405 = vst [vmem:[#allocation2 + $0x20] sm:$0xff] 0.0
          %406 = vst [vmem:[#allocation2 + $0x28] sm:$0xff] 0.0
          %407 = vst [vmem:[#allocation2 + $0x30] sm:$0xff] 0.0
          %408 = vst [vmem:[#allocation2 + $0x38] sm:$0xff] 0.0
          %409 = vst [vmem:[#allocation2 + $0x40] sm:$0xff] 0.0
          %410 = vst [vmem:[#allocation2 + $0x48] sm:$0xff] 0.0
          %411 = vst [vmem:[#allocation2 + $0x50] sm:$0xff] 0.0
          %412 = vst [vmem:[#allocation2 + $0x58] sm:$0xff] 0.0
          %413 = vst [vmem:[#allocation2 + $0x60] sm:$0xff] 0.0
          %414 = vst [vmem:[#allocation2 + $0x68] sm:$0xff] 0.0
          %415 = vst [vmem:[#allocation2 + $0x70] sm:$0xff] 0.0
          %416 = vst [vmem:[#allocation2 + $0x78] sm:$0xff] 0.0
          %vm417 = vcmask 7168
          %418 = vst.msk [vmem:[#allocation3] sm:$0xff] %vm417, 0.0
          %419 = vst.msk [vmem:[#allocation3 + $0x8] sm:$0xff] %vm417, 0.0
          %420 = vst.msk [vmem:[#allocation3 + $0x10] sm:$0xff] %vm417, 0.0
          %421 = vst.msk [vmem:[#allocation3 + $0x18] sm:$0xff] %vm417, 0.0
          %422 = vst.msk [vmem:[#allocation3 + $0x20] sm:$0xff] %vm417, 0.0
          %423 = vst.msk [vmem:[#allocation3 + $0x28] sm:$0xff] %vm417, 0.0
          %424 = vst.msk [vmem:[#allocation3 + $0x30] sm:$0xff] %vm417, 0.0
          %425 = vst.msk [vmem:[#allocation3 + $0x38] sm:$0xff] %vm417, 0.0
          %426 = vst.msk [vmem:[#allocation3 + $0x40] sm:$0xff] %vm417, 0.0
          %427 = vst.msk [vmem:[#allocation3 + $0x48] sm:$0xff] %vm417, 0.0
          %428 = vst.msk [vmem:[#allocation3 + $0x50] sm:$0xff] %vm417, 0.0
          %429 = vst.msk [vmem:[#allocation3 + $0x58] sm:$0xff] %vm417, 0.0
          %430 = vst.msk [vmem:[#allocation3 + $0x60] sm:$0xff] %vm417, 0.0
          %431 = vst.msk [vmem:[#allocation3 + $0x68] sm:$0xff] %vm417, 0.0
          %432 = vst.msk [vmem:[#allocation3 + $0x70] sm:$0xff] %vm417, 0.0
          %433 = vst.msk [vmem:[#allocation3 + $0x78] sm:$0xff] %vm417, 0.0
        $region68: #{tpu_custom_call.1} parent=43 // pred_fallthru
          _
        %v434 = vld [vmem:[%s327] sm:$0xf]
        %v435 = vld [vmem:[%s327 + $0x4] sm:$0xf]
        %v436 = vld [vmem:[%s327 + $0x8] sm:$0xf]
        %v437 = vld [vmem:[%s327 + $0xc] sm:$0xf]
        %v438 = vld [vmem:[%s327 + $0x10] sm:$0xf]
        %v439 = vld [vmem:[%s327 + $0x14] sm:$0xf]
        %v440 = vld [vmem:[%s327 + $0x18] sm:$0xf]
        %v441 = vld [vmem:[%s327 + $0x1c] sm:$0xf]
        %v442 = vld [vmem:[%s327 + $0x20] sm:$0xf]
        %v443 = vld [vmem:[%s327 + $0x24] sm:$0xf]
        %v444 = vld [vmem:[%s327 + $0x28] sm:$0xf]
        %v445 = vld [vmem:[%s327 + $0x2c] sm:$0xf]
        %v446 = vld [vmem:[%s327 + $0x30] sm:$0xf]
        %v447 = vld [vmem:[%s327 + $0x34] sm:$0xf]
        %v448 = vld [vmem:[%s327 + $0x38] sm:$0xf]
        %v449 = vld [vmem:[%s327 + $0x3c] sm:$0xf]
        %v450 = vld [vmem:[#allocation3] sm:$0xff]
        %v451 = vld [vmem:[#allocation3 + $0x8] sm:$0xff]
        %v452 = vld [vmem:[#allocation3 + $0x10] sm:$0xff]
        %v453 = vld [vmem:[#allocation3 + $0x18] sm:$0xff]
        %v454 = vld [vmem:[#allocation3 + $0x20] sm:$0xff]
        %v455 = vld [vmem:[#allocation3 + $0x28] sm:$0xff]
        %v456 = vld [vmem:[#allocation3 + $0x30] sm:$0xff]
        %v457 = vld [vmem:[#allocation3 + $0x38] sm:$0xff]
        %v458 = vld [vmem:[#allocation3 + $0x40] sm:$0xff]
        %v459 = vld [vmem:[#allocation3 + $0x48] sm:$0xff]
        %v460 = vld [vmem:[#allocation3 + $0x50] sm:$0xff]
        %v461 = vld [vmem:[#allocation3 + $0x58] sm:$0xff]
        %v462 = vld [vmem:[#allocation3 + $0x60] sm:$0xff]
        %v463 = vld [vmem:[#allocation3 + $0x68] sm:$0xff]
        %v464 = vld [vmem:[#allocation3 + $0x70] sm:$0xff]
        %v465 = vld [vmem:[#allocation3 + $0x78] sm:$0xff]
        %v466 = vunpack.c.l.bf16 %v434
        %v467 = vunpack.c.l.bf16 %v435
        %v468 = vunpack.c.l.bf16 %v436
        %v469 = vunpack.c.l.bf16 %v437
        %v470 = vunpack.c.l.bf16 %v438
        %v471 = vunpack.c.l.bf16 %v439
        %v472 = vunpack.c.l.bf16 %v440
        %v473 = vunpack.c.l.bf16 %v441
        %v474 = vunpack.c.l.bf16 %v442
        %v475 = vunpack.c.l.bf16 %v443
        %v476 = vunpack.c.l.bf16 %v444
        %v477 = vunpack.c.l.bf16 %v445
        %v478 = vunpack.c.l.bf16 %v446
        %v479 = vunpack.c.l.bf16 %v447
        %v480 = vunpack.c.l.bf16 %v448
        %v481 = vunpack.c.l.bf16 %v449
        %482 = vadd.xlane.f32.xlu0 %v466
        %v483 = vpop.xlane.xlu0 %482
        %484 = vadd.xlane.f32.xlu0 %v467
        %v485 = vpop.xlane.xlu0 %484
        %486 = vadd.xlane.f32.xlu0 %v468
        %v487 = vpop.xlane.xlu0 %486
        %488 = vadd.xlane.f32.xlu0 %v469
        %v489 = vpop.xlane.xlu0 %488
        %490 = vadd.xlane.f32.xlu0 %v470
        %v491 = vpop.xlane.xlu0 %490
        %492 = vadd.xlane.f32.xlu0 %v471
        %v493 = vpop.xlane.xlu0 %492
        %494 = vadd.xlane.f32.xlu0 %v472
        %v495 = vpop.xlane.xlu0 %494
        %496 = vadd.xlane.f32.xlu0 %v473
        %v497 = vpop.xlane.xlu0 %496
        %498 = vadd.xlane.f32.xlu0 %v474
        %v499 = vpop.xlane.xlu0 %498
        %500 = vadd.xlane.f32.xlu0 %v475
        %v501 = vpop.xlane.xlu0 %500
        %502 = vadd.xlane.f32.xlu0 %v476
        %v503 = vpop.xlane.xlu0 %502
        %504 = vadd.xlane.f32.xlu0 %v477
        %v505 = vpop.xlane.xlu0 %504
        %506 = vadd.xlane.f32.xlu0 %v478
        %v507 = vpop.xlane.xlu0 %506
        %508 = vadd.xlane.f32.xlu0 %v479
        %v509 = vpop.xlane.xlu0 %508
        %510 = vadd.xlane.f32.xlu0 %v480
        %v511 = vpop.xlane.xlu0 %510
        %512 = vadd.xlane.f32.xlu0 %v481
        %v513 = vpop.xlane.xlu0 %512
        %v514 = vadd.f32 %v450, %v483
        %v515 = vadd.f32 %v451, %v485
        %v516 = vadd.f32 %v452, %v487
        %v517 = vadd.f32 %v453, %v489
        %v518 = vadd.f32 %v454, %v491
        %v519 = vadd.f32 %v455, %v493
        %v520 = vadd.f32 %v456, %v495
        %v521 = vadd.f32 %v457, %v497
        %v522 = vadd.f32 %v458, %v499
        %v523 = vadd.f32 %v459, %v501
        %v524 = vadd.f32 %v460, %v503
        %v525 = vadd.f32 %v461, %v505
        %v526 = vadd.f32 %v462, %v507
        %v527 = vadd.f32 %v463, %v509
        %v528 = vadd.f32 %v464, %v511
        %v529 = vadd.f32 %v465, %v513
        %vm530 = vcmask 7168
        %531 = vst.msk [vmem:[#allocation3] sm:$0xff] %vm530, %v514
        %532 = vst.msk [vmem:[#allocation3 + $0x8] sm:$0xff] %vm530, %v515
        %533 = vst.msk [vmem:[#allocation3 + $0x10] sm:$0xff] %vm530, %v516
        %534 = vst.msk [vmem:[#allocation3 + $0x18] sm:$0xff] %vm530, %v517
        %535 = vst.msk [vmem:[#allocation3 + $0x20] sm:$0xff] %vm530, %v518
        %536 = vst.msk [vmem:[#allocation3 + $0x28] sm:$0xff] %vm530, %v519
        %537 = vst.msk [vmem:[#allocation3 + $0x30] sm:$0xff] %vm530, %v520
        %538 = vst.msk [vmem:[#allocation3 + $0x38] sm:$0xff] %vm530, %v521
        %539 = vst.msk [vmem:[#allocation3 + $0x40] sm:$0xff] %vm530, %v522
        %540 = vst.msk [vmem:[#allocation3 + $0x48] sm:$0xff] %vm530, %v523
        %541 = vst.msk [vmem:[#allocation3 + $0x50] sm:$0xff] %vm530, %v524
        %542 = vst.msk [vmem:[#allocation3 + $0x58] sm:$0xff] %vm530, %v525
        %543 = vst.msk [vmem:[#allocation3 + $0x60] sm:$0xff] %vm530, %v526
        %544 = vst.msk [vmem:[#allocation3 + $0x68] sm:$0xff] %vm530, %v527
        %545 = vst.msk [vmem:[#allocation3 + $0x70] sm:$0xff] %vm530, %v528
        %546 = vst.msk [vmem:[#allocation3 + $0x78] sm:$0xff] %vm530, %v529
        %v547 = vld [vmem:[#allocation2] sm:$0xff]
        %v548 = vld [vmem:[#allocation2 + $0x8] sm:$0xff]
        %v549 = vld [vmem:[#allocation2 + $0x10] sm:$0xff]
        %v550 = vld [vmem:[#allocation2 + $0x18] sm:$0xff]
        %v551 = vld [vmem:[#allocation2 + $0x20] sm:$0xff]
        %v552 = vld [vmem:[#allocation2 + $0x28] sm:$0xff]
        %v553 = vld [vmem:[#allocation2 + $0x30] sm:$0xff]
        %v554 = vld [vmem:[#allocation2 + $0x38] sm:$0xff]
        %v555 = vld [vmem:[#allocation2 + $0x40] sm:$0xff]
        %v556 = vld [vmem:[#allocation2 + $0x48] sm:$0xff]
        %v557 = vld [vmem:[#allocation2 + $0x50] sm:$0xff]
        %v558 = vld [vmem:[#allocation2 + $0x58] sm:$0xff]
        %v559 = vld [vmem:[#allocation2 + $0x60] sm:$0xff]
        %v560 = vld [vmem:[#allocation2 + $0x68] sm:$0xff]
        %v561 = vld [vmem:[#allocation2 + $0x70] sm:$0xff]
        %v562 = vld [vmem:[#allocation2 + $0x78] sm:$0xff]
        %v563 = vld [vmem:[%s336] sm:$0xf]
        %v564 = vld [vmem:[%s336 + $0x4] sm:$0xf]
        %v565 = vld [vmem:[%s336 + $0x8] sm:$0xf]
        %v566 = vld [vmem:[%s336 + $0xc] sm:$0xf]
        %v567 = vld [vmem:[%s336 + $0x10] sm:$0xf]
        %v568 = vld [vmem:[%s336 + $0x14] sm:$0xf]
        %v569 = vld [vmem:[%s336 + $0x18] sm:$0xf]
        %v570 = vld [vmem:[%s336 + $0x1c] sm:$0xf]
        %v571 = vld [vmem:[%s336 + $0x20] sm:$0xf]
        %v572 = vld [vmem:[%s336 + $0x24] sm:$0xf]
        %v573 = vld [vmem:[%s336 + $0x28] sm:$0xf]
        %v574 = vld [vmem:[%s336 + $0x2c] sm:$0xf]
        %v575 = vld [vmem:[%s336 + $0x30] sm:$0xf]
        %v576 = vld [vmem:[%s336 + $0x34] sm:$0xf]
        %v577 = vld [vmem:[%s336 + $0x38] sm:$0xf]
        %v578 = vld [vmem:[%s336 + $0x3c] sm:$0xf]
        %v595 = vunpack.c.l.b16 %v434
        %v596 = vunpack.c.l.b16 %v435
        %v597 = vunpack.c.l.b16 %v436
        %v598 = vunpack.c.l.b16 %v437
        %v599 = vunpack.c.l.b16 %v438
        %v600 = vunpack.c.l.b16 %v439
        %v601 = vunpack.c.l.b16 %v440
        %v602 = vunpack.c.l.b16 %v441
        %v603 = vunpack.c.l.b16 %v442
        %v604 = vunpack.c.l.b16 %v443
        %v605 = vunpack.c.l.b16 %v444
        %v606 = vunpack.c.l.b16 %v445
        %v607 = vunpack.c.l.b16 %v446
        %v608 = vunpack.c.l.b16 %v447
        %v609 = vunpack.c.l.b16 %v448
        %v610 = vunpack.c.l.b16 %v449
        %v611 = vpack.c.b16 %v596, %v595
        %v612 = vpack.c.b16 %v598, %v597
        %v613 = vpack.c.b16 %v600, %v599
        %v614 = vpack.c.b16 %v602, %v601
        %v615 = vpack.c.b16 %v604, %v603
        %v616 = vpack.c.b16 %v606, %v605
        %v617 = vpack.c.b16 %v608, %v607
        %v618 = vpack.c.b16 %v610, %v609
        %v643 = vunpack.c.l.b16 %v563
        %v644 = vunpack.c.l.b16 %v564
        %v645 = vunpack.c.l.b16 %v565
        %v646 = vunpack.c.l.b16 %v566
        %v647 = vunpack.c.l.b16 %v567
        %v648 = vunpack.c.l.b16 %v568
        %v649 = vunpack.c.l.b16 %v569
        %v650 = vunpack.c.l.b16 %v570
        %v651 = vunpack.c.l.b16 %v571
        %v652 = vunpack.c.l.b16 %v572
        %v653 = vunpack.c.l.b16 %v573
        %v654 = vunpack.c.l.b16 %v574
        %v655 = vunpack.c.l.b16 %v575
        %v656 = vunpack.c.l.b16 %v576
        %v657 = vunpack.c.l.b16 %v577
        %v658 = vunpack.c.l.b16 %v578
        %v659 = vpack.c.b16 %v644, %v643
        %v660 = vpack.c.b16 %v646, %v645
        %v661 = vpack.c.b16 %v648, %v647
        %v662 = vpack.c.b16 %v650, %v649
        %v663 = vpack.c.b16 %v652, %v651
        %v664 = vpack.c.b16 %v654, %v653
        %v665 = vpack.c.b16 %v656, %v655
        %v666 = vpack.c.b16 %v658, %v657
        %675 = vmatprep.subr.bf16.mxu0 0
        %676 = vmatpush1.bf16.msra.mxu0 %v666
        %677 = vmatprep.subr.bf16.mxu0 0
        %678 = vmatpush1.bf16.msra.mxu0 %v665
        %679 = vmatprep.subr.bf16.mxu0 0
        %680 = vmatpush1.bf16.msra.mxu0 %v664
        %681 = vmatprep.subr.bf16.mxu0 0
        %682 = vmatpush1.bf16.msra.mxu0 %v663
        %683 = vmatprep.subr.bf16.mxu0 0
        %684 = vmatpush1.bf16.msra.mxu0 %v662
        %685 = vmatprep.subr.bf16.mxu0 0
        %686 = vmatpush1.bf16.msra.mxu0 %v661
        %687 = vmatprep.subr.bf16.mxu0 0
        %688 = vmatpush1.bf16.msra.mxu0 %v660
        %689 = vmatprep.subr.bf16.mxu0 0
        %690 = vmatpush1.bf16.msra.mxu0 %v659
        %691 = vmatprep.subr.bf16.mxu0 0
        %692 = vmatpush2.bf16.msra.mxu0 0
        %693 = vmatprep.subr.bf16.mxu0 0
        %694 = vmatpush2.bf16.msra.mxu0 0
        %695 = vmatprep.subr.bf16.mxu0 0
        %696 = vmatpush2.bf16.msra.mxu0 0
        %697 = vmatprep.subr.bf16.mxu0 0
        %698 = vmatpush2.bf16.msra.mxu0 0
        %699 = vmatprep.subr.bf16.mxu0 0
        %700 = vmatpush2.bf16.msra.mxu0 0
        %701 = vmatprep.subr.bf16.mxu0 0
        %702 = vmatpush2.bf16.msra.mxu0 0
        %703 = vmatprep.subr.bf16.mxu0 0
        %704 = vmatpush2.bf16.msra.mxu0 0
        %705 = vmatprep.subr.bf16.mxu0 0
        %706 = vmatpush2.bf16.msra.mxu0 0
        %707 = vmatprep.mubr.bf16.mxu0 0
        %708 = vmatmul.mubr.bf16.gmra.mxu0 %v611
        %v709 = vpop.f32.mrf.mxu0
        %v710 = vadd.f32 0.0, %v709
        %v711 = vpop.f32.mrf.mxu0
        %v712 = vpop.f32.mrf.mxu0
        %v713 = vadd.f32 0.0, %v712
        %v714 = vpop.f32.mrf.mxu0
        %715 = vmatprep.mubr.bf16.mxu0 0
        %716 = vmatmul.mubr.bf16.gmra.mxu0 %v612
        %v717 = vpop.f32.mrf.mxu0
        %v718 = vadd.f32 0.0, %v717
        %v719 = vpop.f32.mrf.mxu0
        %v720 = vpop.f32.mrf.mxu0
        %v721 = vadd.f32 0.0, %v720
        %v722 = vpop.f32.mrf.mxu0
        %723 = vmatprep.mubr.bf16.mxu0 0
        %724 = vmatmul.mubr.bf16.gmra.mxu0 %v613
        %v725 = vpop.f32.mrf.mxu0
        %v726 = vadd.f32 0.0, %v725
        %v727 = vpop.f32.mrf.mxu0
        %v728 = vpop.f32.mrf.mxu0
        %v729 = vadd.f32 0.0, %v728
        %v730 = vpop.f32.mrf.mxu0
        %731 = vmatprep.mubr.bf16.mxu0 0
        %732 = vmatmul.mubr.bf16.gmra.mxu0 %v614
        %v733 = vpop.f32.mrf.mxu0
        %v734 = vadd.f32 0.0, %v733
        %v735 = vpop.f32.mrf.mxu0
        %v736 = vpop.f32.mrf.mxu0
        %v737 = vadd.f32 0.0, %v736
        %v738 = vpop.f32.mrf.mxu0
        %739 = vmatprep.mubr.bf16.mxu0 0
        %740 = vmatmul.mubr.bf16.gmra.mxu0 %v615
        %v741 = vpop.f32.mrf.mxu0
        %v742 = vadd.f32 0.0, %v741
        %v743 = vpop.f32.mrf.mxu0
        %v744 = vpop.f32.mrf.mxu0
        %v745 = vadd.f32 0.0, %v744
        %v746 = vpop.f32.mrf.mxu0
        %747 = vmatprep.mubr.bf16.mxu0 0
        %748 = vmatmul.mubr.bf16.gmra.mxu0 %v616
        %v749 = vpop.f32.mrf.mxu0
        %v750 = vadd.f32 0.0, %v749
        %v751 = vpop.f32.mrf.mxu0
        %v752 = vpop.f32.mrf.mxu0
        %v753 = vadd.f32 0.0, %v752
        %v754 = vpop.f32.mrf.mxu0
        %755 = vmatprep.mubr.bf16.mxu0 0
        %756 = vmatmul.mubr.bf16.gmra.mxu0 %v617
        %v757 = vpop.f32.mrf.mxu0
        %v758 = vadd.f32 0.0, %v757
        %v759 = vpop.f32.mrf.mxu0
        %v760 = vpop.f32.mrf.mxu0
        %v761 = vadd.f32 0.0, %v760
        %v762 = vpop.f32.mrf.mxu0
        %763 = vmatprep.mubr.bf16.mxu0 0
        %764 = vmatmul.mubr.bf16.gmra.mxu0 %v618
        %v765 = vpop.f32.mrf.mxu0
        %v766 = vadd.f32 0.0, %v765
        %v767 = vpop.f32.mrf.mxu0
        %v768 = vpop.f32.mrf.mxu0
        %v769 = vadd.f32 0.0, %v768
        %v770 = vpop.f32.mrf.mxu0
        %771 = vdwg.mxu0
        %v772 = vadd.f32 %v547, %v710
        %v773 = vadd.f32 %v548, %v713
        %v774 = vadd.f32 %v549, %v718
        %v775 = vadd.f32 %v550, %v721
        %v776 = vadd.f32 %v551, %v726
        %v777 = vadd.f32 %v552, %v729
        %v778 = vadd.f32 %v553, %v734
        %v779 = vadd.f32 %v554, %v737
        %v780 = vadd.f32 %v555, %v742
        %v781 = vadd.f32 %v556, %v745
        %v782 = vadd.f32 %v557, %v750
        %v783 = vadd.f32 %v558, %v753
        %v784 = vadd.f32 %v559, %v758
        %v785 = vadd.f32 %v560, %v761
        %v786 = vadd.f32 %v561, %v766
        %v787 = vadd.f32 %v562, %v769
        %788 = vst [vmem:[#allocation2] sm:$0xff] %v772
        %789 = vst [vmem:[#allocation2 + $0x8] sm:$0xff] %v773
        %790 = vst [vmem:[#allocation2 + $0x10] sm:$0xff] %v774
        %791 = vst [vmem:[#allocation2 + $0x18] sm:$0xff] %v775
        %792 = vst [vmem:[#allocation2 + $0x20] sm:$0xff] %v776
        %793 = vst [vmem:[#allocation2 + $0x28] sm:$0xff] %v777
        %794 = vst [vmem:[#allocation2 + $0x30] sm:$0xff] %v778
        %795 = vst [vmem:[#allocation2 + $0x38] sm:$0xff] %v779
        %796 = vst [vmem:[#allocation2 + $0x40] sm:$0xff] %v780
        %797 = vst [vmem:[#allocation2 + $0x48] sm:$0xff] %v781
        %798 = vst [vmem:[#allocation2 + $0x50] sm:$0xff] %v782
        %799 = vst [vmem:[#allocation2 + $0x58] sm:$0xff] %v783
        %800 = vst [vmem:[#allocation2 + $0x60] sm:$0xff] %v784
        %801 = vst [vmem:[#allocation2 + $0x68] sm:$0xff] %v785
        %802 = vst [vmem:[#allocation2 + $0x70] sm:$0xff] %v786
        %803 = vst [vmem:[#allocation2 + $0x78] sm:$0xff] %v787
        %p804 = scmp.eq.s32.totalorder %s32, 1
        // Predicated region
        $region69: #{tpu_custom_call.1} parent=43 // pred_check
          %p805 = pneg %p804
        $region70: #{tpu_custom_call.1} parent=43 // pred_check_branch
          %807 = sbr.rel (%p805) target = $region72
        $region71: #{tpu_custom_call.1} parent=43 // pred_region
          %v808 = vld [vmem:[#allocation3] sm:$0xff]
          %v809 = vld [vmem:[#allocation3 + $0x8] sm:$0xff]
          %v810 = vld [vmem:[#allocation3 + $0x10] sm:$0xff]
          %v811 = vld [vmem:[#allocation3 + $0x18] sm:$0xff]
          %v812 = vld [vmem:[#allocation3 + $0x20] sm:$0xff]
          %v813 = vld [vmem:[#allocation3 + $0x28] sm:$0xff]
          %v814 = vld [vmem:[#allocation3 + $0x30] sm:$0xff]
          %v815 = vld [vmem:[#allocation3 + $0x38] sm:$0xff]
          %v816 = vld [vmem:[#allocation3 + $0x40] sm:$0xff]
          %v817 = vld [vmem:[#allocation3 + $0x48] sm:$0xff]
          %v818 = vld [vmem:[#allocation3 + $0x50] sm:$0xff]
          %v819 = vld [vmem:[#allocation3 + $0x58] sm:$0xff]
          %v820 = vld [vmem:[#allocation3 + $0x60] sm:$0xff]
          %v821 = vld [vmem:[#allocation3 + $0x68] sm:$0xff]
          %v822 = vld [vmem:[#allocation3 + $0x70] sm:$0xff]
          %v823 = vld [vmem:[#allocation3 + $0x78] sm:$0xff]
          %v824 = vmax.f32 %v808, 1.0
          %v825 = vmax.f32 %v809, 1.0
          %v826 = vmax.f32 %v810, 1.0
          %v827 = vmax.f32 %v811, 1.0
          %v828 = vmax.f32 %v812, 1.0
          %v829 = vmax.f32 %v813, 1.0
          %v830 = vmax.f32 %v814, 1.0
          %v831 = vmax.f32 %v815, 1.0
          %v832 = vmax.f32 %v816, 1.0
          %v833 = vmax.f32 %v817, 1.0
          %v834 = vmax.f32 %v818, 1.0
          %v835 = vmax.f32 %v819, 1.0
          %v836 = vmax.f32 %v820, 1.0
          %v837 = vmax.f32 %v821, 1.0
          %v838 = vmax.f32 %v822, 1.0
          %v839 = vmax.f32 %v823, 1.0
          %v840 = vrcp.pop %v824
          %v841 = vrcp.pop %v825
          %v842 = vrcp.pop %v826
          %v843 = vrcp.pop %v827
          %v844 = vrcp.pop %v828
          %v845 = vrcp.pop %v829
          %v846 = vrcp.pop %v830
          %v847 = vrcp.pop %v831
          %v848 = vrcp.pop %v832
          %v849 = vrcp.pop %v833
          %v850 = vrcp.pop %v834
          %v851 = vrcp.pop %v835
          %v852 = vrcp.pop %v836
          %v853 = vrcp.pop %v837
          %v854 = vrcp.pop %v838
          %v855 = vrcp.pop %v839
          %v856 = vld [vmem:[#allocation2] sm:$0xff]
          %v857 = vld [vmem:[#allocation2 + $0x8] sm:$0xff]
          %v858 = vld [vmem:[#allocation2 + $0x10] sm:$0xff]
          %v859 = vld [vmem:[#allocation2 + $0x18] sm:$0xff]
          %v860 = vld [vmem:[#allocation2 + $0x20] sm:$0xff]
          %v861 = vld [vmem:[#allocation2 + $0x28] sm:$0xff]
          %v862 = vld [vmem:[#allocation2 + $0x30] sm:$0xff]
          %v863 = vld [vmem:[#allocation2 + $0x38] sm:$0xff]
          %v864 = vld [vmem:[#allocation2 + $0x40] sm:$0xff]
          %v865 = vld [vmem:[#allocation2 + $0x48] sm:$0xff]
          %v866 = vld [vmem:[#allocation2 + $0x50] sm:$0xff]
          %v867 = vld [vmem:[#allocation2 + $0x58] sm:$0xff]
          %v868 = vld [vmem:[#allocation2 + $0x60] sm:$0xff]
          %v869 = vld [vmem:[#allocation2 + $0x68] sm:$0xff]
          %v870 = vld [vmem:[#allocation2 + $0x70] sm:$0xff]
          %v871 = vld [vmem:[#allocation2 + $0x78] sm:$0xff]
          %v872 = vpack.c.bf16 %v857, %v856
          %v873 = vpack.c.bf16 %v859, %v858
          %v874 = vpack.c.bf16 %v861, %v860
          %v875 = vpack.c.bf16 %v863, %v862
          %v876 = vpack.c.bf16 %v865, %v864
          %v877 = vpack.c.bf16 %v867, %v866
          %v878 = vpack.c.bf16 %v869, %v868
          %v879 = vpack.c.bf16 %v871, %v870
          %v880 = vld [vmem:[#allocation10] sm:$0xf]
          %v881 = vld [vmem:[#allocation10 + $0x4] sm:$0xf]
          %v882 = vld [vmem:[#allocation10 + $0x8] sm:$0xf]
          %v883 = vld [vmem:[#allocation10 + $0xc] sm:$0xf]
          %v884 = vld [vmem:[#allocation10 + $0x10] sm:$0xf]
          %v885 = vld [vmem:[#allocation10 + $0x14] sm:$0xf]
          %v886 = vld [vmem:[#allocation10 + $0x18] sm:$0xf]
          %v887 = vld [vmem:[#allocation10 + $0x1c] sm:$0xf]
          %v888 = vld [vmem:[#allocation10 + $0x20] sm:$0xf]
          %v889 = vld [vmem:[#allocation10 + $0x24] sm:$0xf]
          %v890 = vld [vmem:[#allocation10 + $0x28] sm:$0xf]
          %v891 = vld [vmem:[#allocation10 + $0x2c] sm:$0xf]
          %v892 = vld [vmem:[#allocation10 + $0x30] sm:$0xf]
          %v893 = vld [vmem:[#allocation10 + $0x34] sm:$0xf]
          %v894 = vld [vmem:[#allocation10 + $0x38] sm:$0xf]
          %v895 = vld [vmem:[#allocation10 + $0x3c] sm:$0xf]
          %v912 = vunpack.c.l.b16 %v880
          %v913 = vunpack.c.l.b16 %v881
          %v914 = vunpack.c.l.b16 %v882
          %v915 = vunpack.c.l.b16 %v883
          %v916 = vunpack.c.l.b16 %v884
          %v917 = vunpack.c.l.b16 %v885
          %v918 = vunpack.c.l.b16 %v886
          %v919 = vunpack.c.l.b16 %v887
          %v920 = vunpack.c.l.b16 %v888
          %v921 = vunpack.c.l.b16 %v889
          %v922 = vunpack.c.l.b16 %v890
          %v923 = vunpack.c.l.b16 %v891
          %v924 = vunpack.c.l.b16 %v892
          %v925 = vunpack.c.l.b16 %v893
          %v926 = vunpack.c.l.b16 %v894
          %v927 = vunpack.c.l.b16 %v895
          %v928 = vpack.c.b16 %v913, %v912
          %v929 = vpack.c.b16 %v915, %v914
          %v930 = vpack.c.b16 %v917, %v916
          %v931 = vpack.c.b16 %v919, %v918
          %v932 = vpack.c.b16 %v921, %v920
          %v933 = vpack.c.b16 %v923, %v922
          %v934 = vpack.c.b16 %v925, %v924
          %v935 = vpack.c.b16 %v927, %v926
          %944 = vmatprep.subr.bf16.mxu0 0
          %945 = vmatpush1.bf16.msra.mxu0 %v935
          %946 = vmatprep.subr.bf16.mxu0 0
          %947 = vmatpush1.bf16.msra.mxu0 %v934
          %948 = vmatprep.subr.bf16.mxu0 0
          %949 = vmatpush1.bf16.msra.mxu0 %v933
          %950 = vmatprep.subr.bf16.mxu0 0
          %951 = vmatpush1.bf16.msra.mxu0 %v932
          %952 = vmatprep.subr.bf16.mxu0 0
          %953 = vmatpush1.bf16.msra.mxu0 %v931
          %954 = vmatprep.subr.bf16.mxu0 0
          %955 = vmatpush1.bf16.msra.mxu0 %v930
          %956 = vmatprep.subr.bf16.mxu0 0
          %957 = vmatpush1.bf16.msra.mxu0 %v929
          %958 = vmatprep.subr.bf16.mxu0 0
          %959 = vmatpush1.bf16.msra.mxu0 %v928
          %960 = vmatprep.subr.bf16.mxu0 0
          %961 = vmatpush2.bf16.msra.mxu0 0
          %962 = vmatprep.subr.bf16.mxu0 0
          %963 = vmatpush2.bf16.msra.mxu0 0
          %964 = vmatprep.subr.bf16.mxu0 0
          %965 = vmatpush2.bf16.msra.mxu0 0
          %966 = vmatprep.subr.bf16.mxu0 0
          %967 = vmatpush2.bf16.msra.mxu0 0
          %968 = vmatprep.subr.bf16.mxu0 0
          %969 = vmatpush2.bf16.msra.mxu0 0
          %970 = vmatprep.subr.bf16.mxu0 0
          %971 = vmatpush2.bf16.msra.mxu0 0
          %972 = vmatprep.subr.bf16.mxu0 0
          %973 = vmatpush2.bf16.msra.mxu0 0
          %974 = vmatprep.subr.bf16.mxu0 0
          %975 = vmatpush2.bf16.msra.mxu0 0
          %976 = vmatprep.mubr.bf16.mxu0 0
          %977 = vmatmul.mubr.bf16.gmra.mxu0 %v872
          %v978 = vpop.f32.mrf.mxu0
          %v979 = vadd.f32 0.0, %v978
          %v980 = vpop.f32.mrf.mxu0
          %v981 = vpop.f32.mrf.mxu0
          %v982 = vadd.f32 0.0, %v981
          %v983 = vpop.f32.mrf.mxu0
          %984 = vmatprep.mubr.bf16.mxu0 0
          %985 = vmatmul.mubr.bf16.gmra.mxu0 %v873
          %v986 = vpop.f32.mrf.mxu0
          %v987 = vadd.f32 0.0, %v986
          %v988 = vpop.f32.mrf.mxu0
          %v989 = vpop.f32.mrf.mxu0
          %v990 = vadd.f32 0.0, %v989
          %v991 = vpop.f32.mrf.mxu0
          %992 = vmatprep.mubr.bf16.mxu0 0
          %993 = vmatmul.mubr.bf16.gmra.mxu0 %v874
          %v994 = vpop.f32.mrf.mxu0
          %v995 = vadd.f32 0.0, %v994
          %v996 = vpop.f32.mrf.mxu0
          %v997 = vpop.f32.mrf.mxu0
          %v998 = vadd.f32 0.0, %v997
          %v999 = vpop.f32.mrf.mxu0
          %1000 = vmatprep.mubr.bf16.mxu0 0
          %1001 = vmatmul.mubr.bf16.gmra.mxu0 %v875
          %v1002 = vpop.f32.mrf.mxu0
          %v1003 = vadd.f32 0.0, %v1002
          %v1004 = vpop.f32.mrf.mxu0
          %v1005 = vpop.f32.mrf.mxu0
          %v1006 = vadd.f32 0.0, %v1005
          %v1007 = vpop.f32.mrf.mxu0
          %1008 = vmatprep.mubr.bf16.mxu0 0
          %1009 = vmatmul.mubr.bf16.gmra.mxu0 %v876
          %v1010 = vpop.f32.mrf.mxu0
          %v1011 = vadd.f32 0.0, %v1010
          %v1012 = vpop.f32.mrf.mxu0
          %v1013 = vpop.f32.mrf.mxu0
          %v1014 = vadd.f32 0.0, %v1013
          %v1015 = vpop.f32.mrf.mxu0
          %1016 = vmatprep.mubr.bf16.mxu0 0
          %1017 = vmatmul.mubr.bf16.gmra.mxu0 %v877
          %v1018 = vpop.f32.mrf.mxu0
          %v1019 = vadd.f32 0.0, %v1018
          %v1020 = vpop.f32.mrf.mxu0
          %v1021 = vpop.f32.mrf.mxu0
          %v1022 = vadd.f32 0.0, %v1021
          %v1023 = vpop.f32.mrf.mxu0
          %1024 = vmatprep.mubr.bf16.mxu0 0
          %1025 = vmatmul.mubr.bf16.gmra.mxu0 %v878
          %v1026 = vpop.f32.mrf.mxu0
          %v1027 = vadd.f32 0.0, %v1026
          %v1028 = vpop.f32.mrf.mxu0
          %v1029 = vpop.f32.mrf.mxu0
          %v1030 = vadd.f32 0.0, %v1029
          %v1031 = vpop.f32.mrf.mxu0
          %1032 = vmatprep.mubr.bf16.mxu0 0
          %1033 = vmatmul.mubr.bf16.gmra.mxu0 %v879
          %v1034 = vpop.f32.mrf.mxu0
          %v1035 = vadd.f32 0.0, %v1034
          %v1036 = vpop.f32.mrf.mxu0
          %v1037 = vpop.f32.mrf.mxu0
          %v1038 = vadd.f32 0.0, %v1037
          %v1039 = vpop.f32.mrf.mxu0
          %1040 = vdwg.mxu0
          %1042 = vset.pattern.permute.xlu0 0
          %1043 = vperm.xlu0 %1042, %v840
          %v1044 = vpop.permute.xlu0 %1043
          %1047 = vset.pattern.permute.xlu0 0
          %1048 = vperm.xlu0 %1047, %v841
          %v1049 = vpop.permute.xlu0 %1048
          %1052 = vset.pattern.permute.xlu0 0
          %1053 = vperm.xlu0 %1052, %v842
          %v1054 = vpop.permute.xlu0 %1053
          %1057 = vset.pattern.permute.xlu0 0
          %1058 = vperm.xlu0 %1057, %v843
          %v1059 = vpop.permute.xlu0 %1058
          %1062 = vset.pattern.permute.xlu0 0
          %1063 = vperm.xlu0 %1062, %v844
          %v1064 = vpop.permute.xlu0 %1063
          %1067 = vset.pattern.permute.xlu0 0
          %1068 = vperm.xlu0 %1067, %v845
          %v1069 = vpop.permute.xlu0 %1068
          %1072 = vset.pattern.permute.xlu0 0
          %1073 = vperm.xlu0 %1072, %v846
          %v1074 = vpop.permute.xlu0 %1073
          %1077 = vset.pattern.permute.xlu0 0
          %1078 = vperm.xlu0 %1077, %v847
          %v1079 = vpop.permute.xlu0 %1078
          %1082 = vset.pattern.permute.xlu0 0
          %1083 = vperm.xlu0 %1082, %v848
          %v1084 = vpop.permute.xlu0 %1083
          %1087 = vset.pattern.permute.xlu0 0
          %1088 = vperm.xlu0 %1087, %v849
          %v1089 = vpop.permute.xlu0 %1088
          %1092 = vset.pattern.permute.xlu0 0
          %1093 = vperm.xlu0 %1092, %v850
          %v1094 = vpop.permute.xlu0 %1093
          %1097 = vset.pattern.permute.xlu0 0
          %1098 = vperm.xlu0 %1097, %v851
          %v1099 = vpop.permute.xlu0 %1098
          %1102 = vset.pattern.permute.xlu0 0
          %1103 = vperm.xlu0 %1102, %v852
          %v1104 = vpop.permute.xlu0 %1103
          %1107 = vset.pattern.permute.xlu0 0
          %1108 = vperm.xlu0 %1107, %v853
          %v1109 = vpop.permute.xlu0 %1108
          %1112 = vset.pattern.permute.xlu0 0
          %1113 = vperm.xlu0 %1112, %v854
          %v1114 = vpop.permute.xlu0 %1113
          %1117 = vset.pattern.permute.xlu0 0
          %1118 = vperm.xlu0 %1117, %v855
          %v1119 = vpop.permute.xlu0 %1118
          %v1121 = vmul.f32 %v979, %v1044
          %v1122 = vmul.f32 %v982, %v1049
          %v1123 = vmul.f32 %v987, %v1054
          %v1124 = vmul.f32 %v990, %v1059
          %v1125 = vmul.f32 %v995, %v1064
          %v1126 = vmul.f32 %v998, %v1069
          %v1127 = vmul.f32 %v1003, %v1074
          %v1128 = vmul.f32 %v1006, %v1079
          %v1129 = vmul.f32 %v1011, %v1084
          %v1130 = vmul.f32 %v1014, %v1089
          %v1131 = vmul.f32 %v1019, %v1094
          %v1132 = vmul.f32 %v1022, %v1099
          %v1133 = vmul.f32 %v1027, %v1104
          %v1134 = vmul.f32 %v1030, %v1109
          %v1135 = vmul.f32 %v1035, %v1114
          %v1136 = vmul.f32 %v1038, %v1119
          %v1137 = vld [vmem:[%s345] sm:$0xf]
          %v1138 = vld [vmem:[%s345 + $0x4] sm:$0xf]
          %v1139 = vld [vmem:[%s345 + $0x8] sm:$0xf]
          %v1140 = vld [vmem:[%s345 + $0xc] sm:$0xf]
          %v1141 = vld [vmem:[%s345 + $0x10] sm:$0xf]
          %v1142 = vld [vmem:[%s345 + $0x14] sm:$0xf]
          %v1143 = vld [vmem:[%s345 + $0x18] sm:$0xf]
          %v1144 = vld [vmem:[%s345 + $0x1c] sm:$0xf]
          %v1145 = vld [vmem:[%s345 + $0x20] sm:$0xf]
          %v1146 = vld [vmem:[%s345 + $0x24] sm:$0xf]
          %v1147 = vld [vmem:[%s345 + $0x28] sm:$0xf]
          %v1148 = vld [vmem:[%s345 + $0x2c] sm:$0xf]
          %v1149 = vld [vmem:[%s345 + $0x30] sm:$0xf]
          %v1150 = vld [vmem:[%s345 + $0x34] sm:$0xf]
          %v1151 = vld [vmem:[%s345 + $0x38] sm:$0xf]
          %v1152 = vld [vmem:[%s345 + $0x3c] sm:$0xf]
          %v1153 = vld [vmem:[#allocation12] sm:$0xf]
          %v1154 = vld [vmem:[#allocation12 + $0x4] sm:$0xf]
          %v1155 = vld [vmem:[#allocation12 + $0x8] sm:$0xf]
          %v1156 = vld [vmem:[#allocation12 + $0xc] sm:$0xf]
          %v1157 = vld [vmem:[#allocation12 + $0x10] sm:$0xf]
          %v1158 = vld [vmem:[#allocation12 + $0x14] sm:$0xf]
          %v1159 = vld [vmem:[#allocation12 + $0x18] sm:$0xf]
          %v1160 = vld [vmem:[#allocation12 + $0x1c] sm:$0xf]
          %v1161 = vld [vmem:[#allocation12 + $0x20] sm:$0xf]
          %v1162 = vld [vmem:[#allocation12 + $0x24] sm:$0xf]
          %v1163 = vld [vmem:[#allocation12 + $0x28] sm:$0xf]
          %v1164 = vld [vmem:[#allocation12 + $0x2c] sm:$0xf]
          %v1165 = vld [vmem:[#allocation12 + $0x30] sm:$0xf]
          %v1166 = vld [vmem:[#allocation12 + $0x34] sm:$0xf]
          %v1167 = vld [vmem:[#allocation12 + $0x38] sm:$0xf]
          %v1168 = vld [vmem:[#allocation12 + $0x3c] sm:$0xf]
          %v1185 = vunpack.c.l.b16 %v1137
          %v1186 = vunpack.c.l.b16 %v1138
          %v1187 = vunpack.c.l.b16 %v1139
          %v1188 = vunpack.c.l.b16 %v1140
          %v1189 = vunpack.c.l.b16 %v1141
          %v1190 = vunpack.c.l.b16 %v1142
          %v1191 = vunpack.c.l.b16 %v1143
          %v1192 = vunpack.c.l.b16 %v1144
          %v1193 = vunpack.c.l.b16 %v1145
          %v1194 = vunpack.c.l.b16 %v1146
          %v1195 = vunpack.c.l.b16 %v1147
          %v1196 = vunpack.c.l.b16 %v1148
          %v1197 = vunpack.c.l.b16 %v1149
          %v1198 = vunpack.c.l.b16 %v1150
          %v1199 = vunpack.c.l.b16 %v1151
          %v1200 = vunpack.c.l.b16 %v1152
          %v1201 = vpack.c.b16 %v1186, %v1185
          %v1202 = vpack.c.b16 %v1188, %v1187
          %v1203 = vpack.c.b16 %v1190, %v1189
          %v1204 = vpack.c.b16 %v1192, %v1191
          %v1205 = vpack.c.b16 %v1194, %v1193
          %v1206 = vpack.c.b16 %v1196, %v1195
          %v1207 = vpack.c.b16 %v1198, %v1197
          %v1208 = vpack.c.b16 %v1200, %v1199
          %v1233 = vunpack.c.l.b16 %v1153
          %v1234 = vunpack.c.l.b16 %v1154
          %v1235 = vunpack.c.l.b16 %v1155
          %v1236 = vunpack.c.l.b16 %v1156
          %v1237 = vunpack.c.l.b16 %v1157
          %v1238 = vunpack.c.l.b16 %v1158
          %v1239 = vunpack.c.l.b16 %v1159
          %v1240 = vunpack.c.l.b16 %v1160
          %v1241 = vunpack.c.l.b16 %v1161
          %v1242 = vunpack.c.l.b16 %v1162
          %v1243 = vunpack.c.l.b16 %v1163
          %v1244 = vunpack.c.l.b16 %v1164
          %v1245 = vunpack.c.l.b16 %v1165
          %v1246 = vunpack.c.l.b16 %v1166
          %v1247 = vunpack.c.l.b16 %v1167
          %v1248 = vunpack.c.l.b16 %v1168
          %v1249 = vpack.c.b16 %v1234, %v1233
          %v1250 = vpack.c.b16 %v1236, %v1235
          %v1251 = vpack.c.b16 %v1238, %v1237
          %v1252 = vpack.c.b16 %v1240, %v1239
          %v1253 = vpack.c.b16 %v1242, %v1241
          %v1254 = vpack.c.b16 %v1244, %v1243
          %v1255 = vpack.c.b16 %v1246, %v1245
          %v1256 = vpack.c.b16 %v1248, %v1247
          %1265 = vmatprep.subr.bf16.mxu0 0
          %1266 = vmatpush1.bf16.msra.mxu0 %v1256
          %1267 = vmatprep.subr.bf16.mxu0 0
          %1268 = vmatpush1.bf16.msra.mxu0 %v1255
          %1269 = vmatprep.subr.bf16.mxu0 0
          %1270 = vmatpush1.bf16.msra.mxu0 %v1254
          %1271 = vmatprep.subr.bf16.mxu0 0
          %1272 = vmatpush1.bf16.msra.mxu0 %v1253
          %1273 = vmatprep.subr.bf16.mxu0 0
          %1274 = vmatpush1.bf16.msra.mxu0 %v1252
          %1275 = vmatprep.subr.bf16.mxu0 0
          %1276 = vmatpush1.bf16.msra.mxu0 %v1251
          %1277 = vmatprep.subr.bf16.mxu0 0
          %1278 = vmatpush1.bf16.msra.mxu0 %v1250
          %1279 = vmatprep.subr.bf16.mxu0 0
          %1280 = vmatpush1.bf16.msra.mxu0 %v1249
          %1281 = vmatprep.subr.bf16.mxu0 0
          %1282 = vmatpush2.bf16.msra.mxu0 0
          %1283 = vmatprep.subr.bf16.mxu0 0
          %1284 = vmatpush2.bf16.msra.mxu0 0
          %1285 = vmatprep.subr.bf16.mxu0 0
          %1286 = vmatpush2.bf16.msra.mxu0 0
          %1287 = vmatprep.subr.bf16.mxu0 0
          %1288 = vmatpush2.bf16.msra.mxu0 0
          %1289 = vmatprep.subr.bf16.mxu0 0
          %1290 = vmatpush2.bf16.msra.mxu0 0
          %1291 = vmatprep.subr.bf16.mxu0 0
          %1292 = vmatpush2.bf16.msra.mxu0 0
          %1293 = vmatprep.subr.bf16.mxu0 0
          %1294 = vmatpush2.bf16.msra.mxu0 0
          %1295 = vmatprep.subr.bf16.mxu0 0
          %1296 = vmatpush2.bf16.msra.mxu0 0
          %1297 = vmatprep.mubr.bf16.mxu0 0
          %1298 = vmatmul.mubr.bf16.gmra.mxu0 %v1201
          %v1299 = vpop.f32.mrf.mxu0
          %v1300 = vadd.f32 %v1121, %v1299
          %v1301 = vpop.f32.mrf.mxu0
          %v1302 = vpop.f32.mrf.mxu0
          %v1303 = vadd.f32 %v1122, %v1302
          %v1304 = vpop.f32.mrf.mxu0
          %1305 = vmatprep.mubr.bf16.mxu0 0
          %1306 = vmatmul.mubr.bf16.gmra.mxu0 %v1202
          %v1307 = vpop.f32.mrf.mxu0
          %v1308 = vadd.f32 %v1123, %v1307
          %v1309 = vpop.f32.mrf.mxu0
          %v1310 = vpop.f32.mrf.mxu0
          %v1311 = vadd.f32 %v1124, %v1310
          %v1312 = vpop.f32.mrf.mxu0
          %1313 = vmatprep.mubr.bf16.mxu0 0
          %1314 = vmatmul.mubr.bf16.gmra.mxu0 %v1203
          %v1315 = vpop.f32.mrf.mxu0
          %v1316 = vadd.f32 %v1125, %v1315
          %v1317 = vpop.f32.mrf.mxu0
          %v1318 = vpop.f32.mrf.mxu0
          %v1319 = vadd.f32 %v1126, %v1318
          %v1320 = vpop.f32.mrf.mxu0
          %1321 = vmatprep.mubr.bf16.mxu0 0
          %1322 = vmatmul.mubr.bf16.gmra.mxu0 %v1204
          %v1323 = vpop.f32.mrf.mxu0
          %v1324 = vadd.f32 %v1127, %v1323
          %v1325 = vpop.f32.mrf.mxu0
          %v1326 = vpop.f32.mrf.mxu0
          %v1327 = vadd.f32 %v1128, %v1326
          %v1328 = vpop.f32.mrf.mxu0
          %1329 = vmatprep.mubr.bf16.mxu0 0
          %1330 = vmatmul.mubr.bf16.gmra.mxu0 %v1205
          %v1331 = vpop.f32.mrf.mxu0
          %v1332 = vadd.f32 %v1129, %v1331
          %v1333 = vpop.f32.mrf.mxu0
          %v1334 = vpop.f32.mrf.mxu0
          %v1335 = vadd.f32 %v1130, %v1334
          %v1336 = vpop.f32.mrf.mxu0
          %1337 = vmatprep.mubr.bf16.mxu0 0
          %1338 = vmatmul.mubr.bf16.gmra.mxu0 %v1206
          %v1339 = vpop.f32.mrf.mxu0
          %v1340 = vadd.f32 %v1131, %v1339
          %v1341 = vpop.f32.mrf.mxu0
          %v1342 = vpop.f32.mrf.mxu0
          %v1343 = vadd.f32 %v1132, %v1342
          %v1344 = vpop.f32.mrf.mxu0
          %1345 = vmatprep.mubr.bf16.mxu0 0
          %1346 = vmatmul.mubr.bf16.gmra.mxu0 %v1207
          %v1347 = vpop.f32.mrf.mxu0
          %v1348 = vadd.f32 %v1133, %v1347
          %v1349 = vpop.f32.mrf.mxu0
          %v1350 = vpop.f32.mrf.mxu0
          %v1351 = vadd.f32 %v1134, %v1350
          %v1352 = vpop.f32.mrf.mxu0
          %1353 = vmatprep.mubr.bf16.mxu0 0
          %1354 = vmatmul.mubr.bf16.gmra.mxu0 %v1208
          %v1355 = vpop.f32.mrf.mxu0
          %v1356 = vadd.f32 %v1135, %v1355
          %v1357 = vpop.f32.mrf.mxu0
          %v1358 = vpop.f32.mrf.mxu0
          %v1359 = vadd.f32 %v1136, %v1358
          %v1360 = vpop.f32.mrf.mxu0
          %1361 = vdwg.mxu0
          %v1362 = vld [vmem:[%s5] sm:$0x1]
          %v1364 = vlaneseq
          %v1365 = vshrl.u32 %v1364, 7
          %v1366 = vsub.s32 0, %v1365
          %v1367 = vrot.slane %v1362, %v1366
          %v1369 = vadd.f32 %v1300, %v1367
          %v1370 = vadd.f32 %v1303, %v1367
          %v1371 = vadd.f32 %v1308, %v1367
          %v1372 = vadd.f32 %v1311, %v1367
          %v1373 = vadd.f32 %v1316, %v1367
          %v1374 = vadd.f32 %v1319, %v1367
          %v1375 = vadd.f32 %v1324, %v1367
          %v1376 = vadd.f32 %v1327, %v1367
          %v1377 = vadd.f32 %v1332, %v1367
          %v1378 = vadd.f32 %v1335, %v1367
          %v1379 = vadd.f32 %v1340, %v1367
          %v1380 = vadd.f32 %v1343, %v1367
          %v1381 = vadd.f32 %v1348, %v1367
          %v1382 = vadd.f32 %v1351, %v1367
          %v1383 = vadd.f32 %v1356, %v1367
          %v1384 = vadd.f32 %v1359, %v1367
          %1385 = vst [vmem:[%s391] sm:$0xff] %v1369
          %1386 = vst [vmem:[%s391 + $0x8] sm:$0xff] %v1370
          %1387 = vst [vmem:[%s391 + $0x10] sm:$0xff] %v1371
          %1388 = vst [vmem:[%s391 + $0x18] sm:$0xff] %v1372
          %1389 = vst [vmem:[%s391 + $0x20] sm:$0xff] %v1373
          %1390 = vst [vmem:[%s391 + $0x28] sm:$0xff] %v1374
          %1391 = vst [vmem:[%s391 + $0x30] sm:$0xff] %v1375
          %1392 = vst [vmem:[%s391 + $0x38] sm:$0xff] %v1376
          %1393 = vst [vmem:[%s391 + $0x40] sm:$0xff] %v1377
          %1394 = vst [vmem:[%s391 + $0x48] sm:$0xff] %v1378
          %1395 = vst [vmem:[%s391 + $0x50] sm:$0xff] %v1379
          %1396 = vst [vmem:[%s391 + $0x58] sm:$0xff] %v1380
          %1397 = vst [vmem:[%s391 + $0x60] sm:$0xff] %v1381
          %1398 = vst [vmem:[%s391 + $0x68] sm:$0xff] %v1382
          %1399 = vst [vmem:[%s391 + $0x70] sm:$0xff] %v1383
          %1400 = vst [vmem:[%s391 + $0x78] sm:$0xff] %v1384
        $region72: #{tpu_custom_call.1} parent=43 // pred_fallthru
          _
        %s1401 = sand.u32 %s190, 1
        %s1402 = scalar_lea.sflag [#allocation6], %s1401
        %s1403 = sand.u32 %s190, 1
        %s1404 = smul.addr %s1403, 128
        %s1405 = scalar_lea.vmem [#allocation13], %s1404
        // Predicated region
        $region73: #{tpu_custom_call.1} parent=43 // pred_check
          %p1406 = pneg %p200
        $region74: #{tpu_custom_call.1} parent=43 // pred_check_branch
          %1408 = sbr.rel (%p1406) target = $region76
        $region75: #{tpu_custom_call.1} parent=43 // pred_region
          %s1409 = smul.u32 16, %s31
          %s1411 = ssub.s32 2048, 2048
          %1412 = vsyncadd %s1402, %s1411
          %s1413 = smul.addr %s1409, 128
          %s1414 = scalar_lea.hbm %s6, %s1413
          %s1415 = sshll.u32 %s1405, 4
          %s1416 = int_to_ptr.vmem [resolvable:$true] %s1415
          %1421 = dma.vmem_to_hbm [thread:$0]  %s1416, 2048, %s1414, %s1402, 128, 128, 8
        $region76: #{tpu_custom_call.1} parent=43 // pred_fallthru
          _
      $region44: #{tpu_custom_call.1} parent=5 // pred_fallthru
        _
      %p1422 = scmp.le.s32.totalorder 2, %s22
      // Predicated region
      $region77: #{tpu_custom_call.1} parent=5 // pred_check
        %p1423 = pneg %p1422
      $region78: #{tpu_custom_call.1} parent=5 // pred_check_branch
        %1425 = sbr.rel (%p1423) target = $region80
      $region79: #{tpu_custom_call.1} parent=5 // pred_region
        %s1426 = ssub.s32 %s22, 2
        // Predicated region
        $region81: #{tpu_custom_call.1} parent=79 // pred_check
          %p1427 = pneg %p206
        $region82: #{tpu_custom_call.1} parent=79 // pred_check_branch
          %1429 = sbr.rel (%p1427) target = $region84
        $region83: #{tpu_custom_call.1} parent=79 // pred_region
          %s1430 = sand.u32 %s191, 1
          %s1431 = scalar_lea.sflag [#allocation6], %s1430
          %s1432 = sand.u32 %s191, 1
          %s1433 = smul.addr %s1432, 128
          %s1434 = scalar_lea.vmem [#allocation13], %s1433
          %1435 = dma.done %s1431, 2048
        $region84: #{tpu_custom_call.1} parent=79 // pred_fallthru
          _
      $region80: #{tpu_custom_call.1} parent=5 // pred_fallthru
        _
    $region6: #{tpu_custom_call.1} parent=1 // loop_footer
      %s26 = sadd.s32 1, %s22
    $region7: #{tpu_custom_call.1} parent=1 // loop_footer_branch
      %21 = sbr.rel target = $region3
    $region8: #{tpu_custom_call.1} parent=1 // loop_exit
      _
    %1436 = vsyncpa [#allocation5], 1
    %s1437 = scalar_lea.sflag [#allocation5], 1
    %1438 = vsyncpa %s1437, 1
    %1439 = vsyncpa [#allocation8], 1
    %s1440 = scalar_lea.sflag [#allocation8], 1
    %1441 = vsyncpa %s1440, 1
    %1442 = vsyncpa [#allocation11], 1
    %1443 = vsyncpa [#allocation6], 1
    %s1444 = scalar_lea.sflag [#allocation6], 1
    %1445 = vsyncpa %s1444, 1

</llo_original>
